<compile_context>
chip_gen: v6e
topology: v6e:2x2x1
jax: 0.10.0
libtpu: 0.0.40
codegen_flags: <defaults>
</compile_context>

<pallas_src>
import functools

import jax
import jax.numpy as jnp
from jax.experimental import pallas as pl
from jax.experimental.pallas import tpu as pltpu


def _hpm_kernel(x_ref, w_ref, o_ref, *, num_bins, seg, out_dims):
    # x_ref: (TN, c, h*w)              natural-layout tile of the input
    # w_ref: (num_bins, c, out_dims)   all per-bin Linear weights (DMA'd once)
    # o_ref: (TN, num_bins*out_dims)   lane-dense output tile
    outs = []
    for b in range(num_bins):                        # static unroll over bins
        xb = x_ref[:, :, b * seg:(b + 1) * seg]      # (TN, c, seg) static slice
        pooled = jnp.mean(xb, axis=-1) + jnp.max(xb, axis=-1)   # (TN, c)
        y = jnp.dot(pooled, w_ref[b], preferred_element_type=jnp.float32)
        outs.append(y)                               # (TN, out_dims)
    # Single dense store (last dim = num_bins*out_dims, multiple of 128 for
    # typical out_dims) -> unmasked vst + lane-dense HBM writeback.
    o_ref[...] = jnp.concatenate(outs, axis=-1).astype(o_ref.dtype)


def _pick_tile_n(n, c, hw, *, bytes_per_elem=4, budget_bytes=16 * 1024 * 1024):
    """Largest n-tile that (a) divides n, (b) keeps the double-buffered x tile
    within a budget sized for v7x's 64 MiB VMEM, and (c) satisfies the (8,128)
    rule on the output block (TN == n or TN % 8 == 0)."""
    per_row = c * hw * bytes_per_elem
    max_tn = max(1, budget_bytes // (2 * per_row))   # 2x for double buffering
    if n <= max_tn:
        return n
    tn = (max_tn // 8) * 8
    while tn >= 8:
        if n % tn == 0:
            return tn
        tn -= 8
    return n  # fallback: whole batch in one tile (bump vmem_limit if hit)


def hpm_forward(x, weights, *, num_bins=16):
    """x: (n, c, h, w) fp32;
    weights: (num_bins, c, out_dims) fp32 (per-bin PyTorch Linear weight,
    transposed so the kernel computes pooled @ W_b)."""
    n, c, h, w = x.shape
    hw = h * w
    # PyTorch's .view(n, c, num_bins, -1) requires exact divisibility.
    assert hw % num_bins == 0, "h*w must be divisible by num_bins"
    seg = hw // num_bins
    out_dims = weights.shape[-1]

    # Free reshape: contiguous collapse of (h, w) -> h*w, no HBM data movement.
    x_flat = x.reshape(n, c, hw)

    tn = _pick_tile_n(n, c, hw)
    grid = (n // tn,)

    kernel = functools.partial(
        _hpm_kernel, num_bins=num_bins, seg=seg, out_dims=out_dims)

    out = pl.pallas_call(
        kernel,
        out_shape=jax.ShapeDtypeStruct((n, num_bins * out_dims), x.dtype),
        grid=grid,
        in_specs=[
            # x tile streamed over the batch axis in its natural layout.
            pl.BlockSpec((tn, c, hw), lambda i: (i, 0, 0)),
            # All per-bin weights, constant block index -> fetched once.
            pl.BlockSpec((num_bins, c, out_dims), lambda i: (0, 0, 0)),
        ],
        # Lane-dense output block.
        out_specs=pl.BlockSpec((tn, num_bins * out_dims), lambda i: (i, 0)),
        compiler_params=pltpu.CompilerParams(
            dimension_semantics=("parallel",),
            vmem_limit_bytes=48 * 1024 * 1024,
        ),
    )(x_flat, weights)

    # Free reshape; matches torch.cat(fc_feature, 1): (n, num_bins, out_dims).
    return out.reshape(n, num_bins, out_dims)


def hpm_reference(x, weights, *, num_bins=16):
    """Pure-JAX reference mirroring the PyTorch forward."""
    n, c, h, w = x.shape
    z = x.reshape(n, c, num_bins, -1)
    z = z.mean(axis=3) + z.max(axis=3)            # (n, c, nb)
    feature = jnp.transpose(z, (0, 2, 1))         # (n, nb, c)
    return jnp.einsum("nbc,bco->nbo", feature, weights)


if __name__ == "__main__":
    # Small shapes consistent with the module: in_dims = c, out_dims chosen.
    n, c, h, w = 2, 4, 16, 16
    out_dims = 32
    num_bins = 16

    key = jax.random.PRNGKey(0)
    kx, kw = jax.random.split(key)
    x = jax.random.normal(kx, (n, c, h, w), dtype=jnp.float32)
    # Per-bin Linear weights stored as (nb, in_dims, out_dims), i.e. the
    # transpose of each PyTorch (out_dims, in_dims) weight.
    weights = jax.random.normal(kw, (num_bins, c, out_dims), dtype=jnp.float32) * 0.05

    out = hpm_forward(x, weights, num_bins=num_bins)
    out = jax.block_until_ready(out)

    ref = hpm_reference(x, weights, num_bins=num_bins)
    assert out.shape == (n, num_bins, out_dims), out.shape
    assert jnp.allclose(out, ref, atol=1e-5, rtol=1e-5), \
        float(jnp.max(jnp.abs(out - ref)))

    print("KERNEL_OK")
</pallas_src>

<mosaic_0001>
module attributes {stable_mosaic.version = 11 : i64} {
  func.func @_hpm_kernel(%arg0: i32, %arg1: memref<2x4x256xf32, #tpu.memory_space<vmem>>, %arg2: memref<16x4x32xf32, #tpu.memory_space<vmem>>, %arg3: memref<2x512xf32, #tpu.memory_space<vmem>>) attributes {dimension_semantics = [#tpu.dimension_semantics<parallel>], iteration_bounds = array<i64: 1>, scalar_prefetch = 0 : i64, scratch_operands = 0 : i64, tpu.core_type = #tpu.core_type<tc>, window_params = [{transform_indices = @transform_0, window_bounds = array<i64: 2, 4, 256>}, {pipeline_mode = #tpu.pipeline_mode<synchronous>, transform_indices = @transform_1, window_bounds = array<i64: 16, 4, 32>}, {transform_indices = @transform_2, window_bounds = array<i64: 2, 512>}]} {
    %c0 = arith.constant 0 : index
    %c0_0 = arith.constant 0 : index
    %c0_1 = arith.constant 0 : index
    %0 = vector.load %arg1[%c0, %c0_0, %c0_1] : memref<2x4x256xf32, #tpu.memory_space<vmem>>, vector<2x4x16xf32>
    %cst = arith.constant dense<0.000000e+00> : vector<2x4xf32>
    %1 = vector.multi_reduction <add>, %0, %cst [2] : vector<2x4x16xf32> to vector<2x4xf32>
    %cst_2 = arith.constant 1.600000e+01 : f32
    %2 = vector.broadcast %cst_2 : f32 to vector<2x4xf32>
    %3 = arith.divf %1, %2 : vector<2x4xf32>
    %cst_3 = arith.constant dense<0xFF800000> : vector<2x4xf32>
    %4 = vector.multi_reduction <maximumf>, %0, %cst_3 [2] : vector<2x4x16xf32> to vector<2x4xf32>
    %5 = arith.addf %3, %4 : vector<2x4xf32>
    %c0_4 = arith.constant 0 : index
    %c0_5 = arith.constant 0 : index
    %c0_6 = arith.constant 0 : index
    %6 = vector.load %arg2[%c0_4, %c0_5, %c0_6] : memref<16x4x32xf32, #tpu.memory_space<vmem>>, vector<1x4x32xf32>
    %7 = vector.shape_cast %6 : vector<1x4x32xf32> to vector<4x32xf32>
    %cst_7 = arith.constant dense<0.000000e+00> : vector<2x32xf32>
    %8 = tpu.matmul %5, %7, %cst_7 {dimension_numbers = #tpu.dot_dimension_numbers<[1], [0], [0], [1], [0, 0, 1, 1], [], []>} : vector<2x4xf32>, vector<4x32xf32>, vector<2x32xf32> -> vector<2x32xf32>
    %c0_8 = arith.constant 0 : index
    %c0_9 = arith.constant 0 : index
    %c16 = arith.constant 16 : index
    %9 = vector.load %arg1[%c0_8, %c0_9, %c16] : memref<2x4x256xf32, #tpu.memory_space<vmem>>, vector<2x4x16xf32>
    %cst_10 = arith.constant dense<0.000000e+00> : vector<2x4xf32>
    %10 = vector.multi_reduction <add>, %9, %cst_10 [2] : vector<2x4x16xf32> to vector<2x4xf32>
    %cst_11 = arith.constant 1.600000e+01 : f32
    %11 = vector.broadcast %cst_11 : f32 to vector<2x4xf32>
    %12 = arith.divf %10, %11 : vector<2x4xf32>
    %cst_12 = arith.constant dense<0xFF800000> : vector<2x4xf32>
    %13 = vector.multi_reduction <maximumf>, %9, %cst_12 [2] : vector<2x4x16xf32> to vector<2x4xf32>
    %14 = arith.addf %12, %13 : vector<2x4xf32>
    %c1 = arith.constant 1 : index
    %c0_13 = arith.constant 0 : index
    %c0_14 = arith.constant 0 : index
    %15 = vector.load %arg2[%c1, %c0_13, %c0_14] : memref<16x4x32xf32, #tpu.memory_space<vmem>>, vector<1x4x32xf32>
    %16 = vector.shape_cast %15 : vector<1x4x32xf32> to vector<4x32xf32>
    %cst_15 = arith.constant dense<0.000000e+00> : vector<2x32xf32>
    %17 = tpu.matmul %14, %16, %cst_15 {dimension_numbers = #tpu.dot_dimension_numbers<[1], [0], [0], [1], [0, 0, 1, 1], [], []>} : vector<2x4xf32>, vector<4x32xf32>, vector<2x32xf32> -> vector<2x32xf32>
    %c0_16 = arith.constant 0 : index
    %c0_17 = arith.constant 0 : index
    %c32 = arith.constant 32 : index
    %18 = vector.load %arg1[%c0_16, %c0_17, %c32] : memref<2x4x256xf32, #tpu.memory_space<vmem>>, vector<2x4x16xf32>
    %cst_18 = arith.constant dense<0.000000e+00> : vector<2x4xf32>
    %19 = vector.multi_reduction <add>, %18, %cst_18 [2] : vector<2x4x16xf32> to vector<2x4xf32>
    %cst_19 = arith.constant 1.600000e+01 : f32
    %20 = vector.broadcast %cst_19 : f32 to vector<2x4xf32>
    %21 = arith.divf %19, %20 : vector<2x4xf32>
    %cst_20 = arith.constant dense<0xFF800000> : vector<2x4xf32>
    %22 = vector.multi_reduction <maximumf>, %18, %cst_20 [2] : vector<2x4x16xf32> to vector<2x4xf32>
    %23 = arith.addf %21, %22 : vector<2x4xf32>
    %c2 = arith.constant 2 : index
    %c0_21 = arith.constant 0 : index
    %c0_22 = arith.constant 0 : index
    %24 = vector.load %arg2[%c2, %c0_21, %c0_22] : memref<16x4x32xf32, #tpu.memory_space<vmem>>, vector<1x4x32xf32>
    %25 = vector.shape_cast %24 : vector<1x4x32xf32> to vector<4x32xf32>
    %cst_23 = arith.constant dense<0.000000e+00> : vector<2x32xf32>
    %26 = tpu.matmul %23, %25, %cst_23 {dimension_numbers = #tpu.dot_dimension_numbers<[1], [0], [0], [1], [0, 0, 1, 1], [], []>} : vector<2x4xf32>, vector<4x32xf32>, vector<2x32xf32> -> vector<2x32xf32>
    %c0_24 = arith.constant 0 : index
    %c0_25 = arith.constant 0 : index
    %c48 = arith.constant 48 : index
    %27 = vector.load %arg1[%c0_24, %c0_25, %c48] : memref<2x4x256xf32, #tpu.memory_space<vmem>>, vector<2x4x16xf32>
    %cst_26 = arith.constant dense<0.000000e+00> : vector<2x4xf32>
    %28 = vector.multi_reduction <add>, %27, %cst_26 [2] : vector<2x4x16xf32> to vector<2x4xf32>
    %cst_27 = arith.constant 1.600000e+01 : f32
    %29 = vector.broadcast %cst_27 : f32 to vector<2x4xf32>
    %30 = arith.divf %28, %29 : vector<2x4xf32>
    %cst_28 = arith.constant dense<0xFF800000> : vector<2x4xf32>
    %31 = vector.multi_reduction <maximumf>, %27, %cst_28 [2] : vector<2x4x16xf32> to vector<2x4xf32>
    %32 = arith.addf %30, %31 : vector<2x4xf32>
    %c3 = arith.constant 3 : index
    %c0_29 = arith.constant 0 : index
    %c0_30 = arith.constant 0 : index
    %33 = vector.load %arg2[%c3, %c0_29, %c0_30] : memref<16x4x32xf32, #tpu.memory_space<vmem>>, vector<1x4x32xf32>
    %34 = vector.shape_cast %33 : vector<1x4x32xf32> to vector<4x32xf32>
    %cst_31 = arith.constant dense<0.000000e+00> : vector<2x32xf32>
    %35 = tpu.matmul %32, %34, %cst_31 {dimension_numbers = #tpu.dot_dimension_numbers<[1], [0], [0], [1], [0, 0, 1, 1], [], []>} : vector<2x4xf32>, vector<4x32xf32>, vector<2x32xf32> -> vector<2x32xf32>
    %c0_32 = arith.constant 0 : index
    %c0_33 = arith.constant 0 : index
    %c64 = arith.constant 64 : index
    %36 = vector.load %arg1[%c0_32, %c0_33, %c64] : memref<2x4x256xf32, #tpu.memory_space<vmem>>, vector<2x4x16xf32>
    %cst_34 = arith.constant dense<0.000000e+00> : vector<2x4xf32>
    %37 = vector.multi_reduction <add>, %36, %cst_34 [2] : vector<2x4x16xf32> to vector<2x4xf32>
    %cst_35 = arith.constant 1.600000e+01 : f32
    %38 = vector.broadcast %cst_35 : f32 to vector<2x4xf32>
    %39 = arith.divf %37, %38 : vector<2x4xf32>
    %cst_36 = arith.constant dense<0xFF800000> : vector<2x4xf32>
    %40 = vector.multi_reduction <maximumf>, %36, %cst_36 [2] : vector<2x4x16xf32> to vector<2x4xf32>
    %41 = arith.addf %39, %40 : vector<2x4xf32>
    %c4 = arith.constant 4 : index
    %c0_37 = arith.constant 0 : index
    %c0_38 = arith.constant 0 : index
    %42 = vector.load %arg2[%c4, %c0_37, %c0_38] : memref<16x4x32xf32, #tpu.memory_space<vmem>>, vector<1x4x32xf32>
    %43 = vector.shape_cast %42 : vector<1x4x32xf32> to vector<4x32xf32>
    %cst_39 = arith.constant dense<0.000000e+00> : vector<2x32xf32>
    %44 = tpu.matmul %41, %43, %cst_39 {dimension_numbers = #tpu.dot_dimension_numbers<[1], [0], [0], [1], [0, 0, 1, 1], [], []>} : vector<2x4xf32>, vector<4x32xf32>, vector<2x32xf32> -> vector<2x32xf32>
    %c0_40 = arith.constant 0 : index
    %c0_41 = arith.constant 0 : index
    %c80 = arith.constant 80 : index
    %45 = vector.load %arg1[%c0_40, %c0_41, %c80] : memref<2x4x256xf32, #tpu.memory_space<vmem>>, vector<2x4x16xf32>
    %cst_42 = arith.constant dense<0.000000e+00> : vector<2x4xf32>
    %46 = vector.multi_reduction <add>, %45, %cst_42 [2] : vector<2x4x16xf32> to vector<2x4xf32>
    %cst_43 = arith.constant 1.600000e+01 : f32
    %47 = vector.broadcast %cst_43 : f32 to vector<2x4xf32>
    %48 = arith.divf %46, %47 : vector<2x4xf32>
    %cst_44 = arith.constant dense<0xFF800000> : vector<2x4xf32>
    %49 = vector.multi_reduction <maximumf>, %45, %cst_44 [2] : vector<2x4x16xf32> to vector<2x4xf32>
    %50 = arith.addf %48, %49 : vector<2x4xf32>
    %c5 = arith.constant 5 : index
    %c0_45 = arith.constant 0 : index
    %c0_46 = arith.constant 0 : index
    %51 = vector.load %arg2[%c5, %c0_45, %c0_46] : memref<16x4x32xf32, #tpu.memory_space<vmem>>, vector<1x4x32xf32>
    %52 = vector.shape_cast %51 : vector<1x4x32xf32> to vector<4x32xf32>
    %cst_47 = arith.constant dense<0.000000e+00> : vector<2x32xf32>
    %53 = tpu.matmul %50, %52, %cst_47 {dimension_numbers = #tpu.dot_dimension_numbers<[1], [0], [0], [1], [0, 0, 1, 1], [], []>} : vector<2x4xf32>, vector<4x32xf32>, vector<2x32xf32> -> vector<2x32xf32>
    %c0_48 = arith.constant 0 : index
    %c0_49 = arith.constant 0 : index
    %c96 = arith.constant 96 : index
    %54 = vector.load %arg1[%c0_48, %c0_49, %c96] : memref<2x4x256xf32, #tpu.memory_space<vmem>>, vector<2x4x16xf32>
    %cst_50 = arith.constant dense<0.000000e+00> : vector<2x4xf32>
    %55 = vector.multi_reduction <add>, %54, %cst_50 [2] : vector<2x4x16xf32> to vector<2x4xf32>
    %cst_51 = arith.constant 1.600000e+01 : f32
    %56 = vector.broadcast %cst_51 : f32 to vector<2x4xf32>
    %57 = arith.divf %55, %56 : vector<2x4xf32>
    %cst_52 = arith.constant dense<0xFF800000> : vector<2x4xf32>
    %58 = vector.multi_reduction <maximumf>, %54, %cst_52 [2] : vector<2x4x16xf32> to vector<2x4xf32>
    %59 = arith.addf %57, %58 : vector<2x4xf32>
    %c6 = arith.constant 6 : index
    %c0_53 = arith.constant 0 : index
    %c0_54 = arith.constant 0 : index
    %60 = vector.load %arg2[%c6, %c0_53, %c0_54] : memref<16x4x32xf32, #tpu.memory_space<vmem>>, vector<1x4x32xf32>
    %61 = vector.shape_cast %60 : vector<1x4x32xf32> to vector<4x32xf32>
    %cst_55 = arith.constant dense<0.000000e+00> : vector<2x32xf32>
    %62 = tpu.matmul %59, %61, %cst_55 {dimension_numbers = #tpu.dot_dimension_numbers<[1], [0], [0], [1], [0, 0, 1, 1], [], []>} : vector<2x4xf32>, vector<4x32xf32>, vector<2x32xf32> -> vector<2x32xf32>
    %c0_56 = arith.constant 0 : index
    %c0_57 = arith.constant 0 : index
    %c112 = arith.constant 112 : index
    %63 = vector.load %arg1[%c0_56, %c0_57, %c112] : memref<2x4x256xf32, #tpu.memory_space<vmem>>, vector<2x4x16xf32>
    %cst_58 = arith.constant dense<0.000000e+00> : vector<2x4xf32>
    %64 = vector.multi_reduction <add>, %63, %cst_58 [2] : vector<2x4x16xf32> to vector<2x4xf32>
    %cst_59 = arith.constant 1.600000e+01 : f32
    %65 = vector.broadcast %cst_59 : f32 to vector<2x4xf32>
    %66 = arith.divf %64, %65 : vector<2x4xf32>
    %cst_60 = arith.constant dense<0xFF800000> : vector<2x4xf32>
    %67 = vector.multi_reduction <maximumf>, %63, %cst_60 [2] : vector<2x4x16xf32> to vector<2x4xf32>
    %68 = arith.addf %66, %67 : vector<2x4xf32>
    %c7 = arith.constant 7 : index
    %c0_61 = arith.constant 0 : index
    %c0_62 = arith.constant 0 : index
    %69 = vector.load %arg2[%c7, %c0_61, %c0_62] : memref<16x4x32xf32, #tpu.memory_space<vmem>>, vector<1x4x32xf32>
    %70 = vector.shape_cast %69 : vector<1x4x32xf32> to vector<4x32xf32>
    %cst_63 = arith.constant dense<0.000000e+00> : vector<2x32xf32>
    %71 = tpu.matmul %68, %70, %cst_63 {dimension_numbers = #tpu.dot_dimension_numbers<[1], [0], [0], [1], [0, 0, 1, 1], [], []>} : vector<2x4xf32>, vector<4x32xf32>, vector<2x32xf32> -> vector<2x32xf32>
    %c0_64 = arith.constant 0 : index
    %c0_65 = arith.constant 0 : index
    %c128 = arith.constant 128 : index
    %72 = vector.load %arg1[%c0_64, %c0_65, %c128] : memref<2x4x256xf32, #tpu.memory_space<vmem>>, vector<2x4x16xf32>
    %cst_66 = arith.constant dense<0.000000e+00> : vector<2x4xf32>
    %73 = vector.multi_reduction <add>, %72, %cst_66 [2] : vector<2x4x16xf32> to vector<2x4xf32>
    %cst_67 = arith.constant 1.600000e+01 : f32
    %74 = vector.broadcast %cst_67 : f32 to vector<2x4xf32>
    %75 = arith.divf %73, %74 : vector<2x4xf32>
    %cst_68 = arith.constant dense<0xFF800000> : vector<2x4xf32>
    %76 = vector.multi_reduction <maximumf>, %72, %cst_68 [2] : vector<2x4x16xf32> to vector<2x4xf32>
    %77 = arith.addf %75, %76 : vector<2x4xf32>
    %c8 = arith.constant 8 : index
    %c0_69 = arith.constant 0 : index
    %c0_70 = arith.constant 0 : index
    %78 = vector.load %arg2[%c8, %c0_69, %c0_70] : memref<16x4x32xf32, #tpu.memory_space<vmem>>, vector<1x4x32xf32>
    %79 = vector.shape_cast %78 : vector<1x4x32xf32> to vector<4x32xf32>
    %cst_71 = arith.constant dense<0.000000e+00> : vector<2x32xf32>
    %80 = tpu.matmul %77, %79, %cst_71 {dimension_numbers = #tpu.dot_dimension_numbers<[1], [0], [0], [1], [0, 0, 1, 1], [], []>} : vector<2x4xf32>, vector<4x32xf32>, vector<2x32xf32> -> vector<2x32xf32>
    %c0_72 = arith.constant 0 : index
    %c0_73 = arith.constant 0 : index
    %c144 = arith.constant 144 : index
    %81 = vector.load %arg1[%c0_72, %c0_73, %c144] : memref<2x4x256xf32, #tpu.memory_space<vmem>>, vector<2x4x16xf32>
    %cst_74 = arith.constant dense<0.000000e+00> : vector<2x4xf32>
    %82 = vector.multi_reduction <add>, %81, %cst_74 [2] : vector<2x4x16xf32> to vector<2x4xf32>
    %cst_75 = arith.constant 1.600000e+01 : f32
    %83 = vector.broadcast %cst_75 : f32 to vector<2x4xf32>
    %84 = arith.divf %82, %83 : vector<2x4xf32>
    %cst_76 = arith.constant dense<0xFF800000> : vector<2x4xf32>
    %85 = vector.multi_reduction <maximumf>, %81, %cst_76 [2] : vector<2x4x16xf32> to vector<2x4xf32>
    %86 = arith.addf %84, %85 : vector<2x4xf32>
    %c9 = arith.constant 9 : index
    %c0_77 = arith.constant 0 : index
    %c0_78 = arith.constant 0 : index
    %87 = vector.load %arg2[%c9, %c0_77, %c0_78] : memref<16x4x32xf32, #tpu.memory_space<vmem>>, vector<1x4x32xf32>
    %88 = vector.shape_cast %87 : vector<1x4x32xf32> to vector<4x32xf32>
    %cst_79 = arith.constant dense<0.000000e+00> : vector<2x32xf32>
    %89 = tpu.matmul %86, %88, %cst_79 {dimension_numbers = #tpu.dot_dimension_numbers<[1], [0], [0], [1], [0, 0, 1, 1], [], []>} : vector<2x4xf32>, vector<4x32xf32>, vector<2x32xf32> -> vector<2x32xf32>
    %c0_80 = arith.constant 0 : index
    %c0_81 = arith.constant 0 : index
    %c160 = arith.constant 160 : index
    %90 = vector.load %arg1[%c0_80, %c0_81, %c160] : memref<2x4x256xf32, #tpu.memory_space<vmem>>, vector<2x4x16xf32>
    %cst_82 = arith.constant dense<0.000000e+00> : vector<2x4xf32>
    %91 = vector.multi_reduction <add>, %90, %cst_82 [2] : vector<2x4x16xf32> to vector<2x4xf32>
    %cst_83 = arith.constant 1.600000e+01 : f32
    %92 = vector.broadcast %cst_83 : f32 to vector<2x4xf32>
    %93 = arith.divf %91, %92 : vector<2x4xf32>
    %cst_84 = arith.constant dense<0xFF800000> : vector<2x4xf32>
    %94 = vector.multi_reduction <maximumf>, %90, %cst_84 [2] : vector<2x4x16xf32> to vector<2x4xf32>
    %95 = arith.addf %93, %94 : vector<2x4xf32>
    %c10 = arith.constant 10 : index
    %c0_85 = arith.constant 0 : index
    %c0_86 = arith.constant 0 : index
    %96 = vector.load %arg2[%c10, %c0_85, %c0_86] : memref<16x4x32xf32, #tpu.memory_space<vmem>>, vector<1x4x32xf32>
    %97 = vector.shape_cast %96 : vector<1x4x32xf32> to vector<4x32xf32>
    %cst_87 = arith.constant dense<0.000000e+00> : vector<2x32xf32>
    %98 = tpu.matmul %95, %97, %cst_87 {dimension_numbers = #tpu.dot_dimension_numbers<[1], [0], [0], [1], [0, 0, 1, 1], [], []>} : vector<2x4xf32>, vector<4x32xf32>, vector<2x32xf32> -> vector<2x32xf32>
    %c0_88 = arith.constant 0 : index
    %c0_89 = arith.constant 0 : index
    %c176 = arith.constant 176 : index
    %99 = vector.load %arg1[%c0_88, %c0_89, %c176] : memref<2x4x256xf32, #tpu.memory_space<vmem>>, vector<2x4x16xf32>
    %cst_90 = arith.constant dense<0.000000e+00> : vector<2x4xf32>
    %100 = vector.multi_reduction <add>, %99, %cst_90 [2] : vector<2x4x16xf32> to vector<2x4xf32>
    %cst_91 = arith.constant 1.600000e+01 : f32
    %101 = vector.broadcast %cst_91 : f32 to vector<2x4xf32>
    %102 = arith.divf %100, %101 : vector<2x4xf32>
    %cst_92 = arith.constant dense<0xFF800000> : vector<2x4xf32>
    %103 = vector.multi_reduction <maximumf>, %99, %cst_92 [2] : vector<2x4x16xf32> to vector<2x4xf32>
    %104 = arith.addf %102, %103 : vector<2x4xf32>
    %c11 = arith.constant 11 : index
    %c0_93 = arith.constant 0 : index
    %c0_94 = arith.constant 0 : index
    %105 = vector.load %arg2[%c11, %c0_93, %c0_94] : memref<16x4x32xf32, #tpu.memory_space<vmem>>, vector<1x4x32xf32>
    %106 = vector.shape_cast %105 : vector<1x4x32xf32> to vector<4x32xf32>
    %cst_95 = arith.constant dense<0.000000e+00> : vector<2x32xf32>
    %107 = tpu.matmul %104, %106, %cst_95 {dimension_numbers = #tpu.dot_dimension_numbers<[1], [0], [0], [1], [0, 0, 1, 1], [], []>} : vector<2x4xf32>, vector<4x32xf32>, vector<2x32xf32> -> vector<2x32xf32>
    %c0_96 = arith.constant 0 : index
    %c0_97 = arith.constant 0 : index
    %c192 = arith.constant 192 : index
    %108 = vector.load %arg1[%c0_96, %c0_97, %c192] : memref<2x4x256xf32, #tpu.memory_space<vmem>>, vector<2x4x16xf32>
    %cst_98 = arith.constant dense<0.000000e+00> : vector<2x4xf32>
    %109 = vector.multi_reduction <add>, %108, %cst_98 [2] : vector<2x4x16xf32> to vector<2x4xf32>
    %cst_99 = arith.constant 1.600000e+01 : f32
    %110 = vector.broadcast %cst_99 : f32 to vector<2x4xf32>
    %111 = arith.divf %109, %110 : vector<2x4xf32>
    %cst_100 = arith.constant dense<0xFF800000> : vector<2x4xf32>
    %112 = vector.multi_reduction <maximumf>, %108, %cst_100 [2] : vector<2x4x16xf32> to vector<2x4xf32>
    %113 = arith.addf %111, %112 : vector<2x4xf32>
    %c12 = arith.constant 12 : index
    %c0_101 = arith.constant 0 : index
    %c0_102 = arith.constant 0 : index
    %114 = vector.load %arg2[%c12, %c0_101, %c0_102] : memref<16x4x32xf32, #tpu.memory_space<vmem>>, vector<1x4x32xf32>
    %115 = vector.shape_cast %114 : vector<1x4x32xf32> to vector<4x32xf32>
    %cst_103 = arith.constant dense<0.000000e+00> : vector<2x32xf32>
    %116 = tpu.matmul %113, %115, %cst_103 {dimension_numbers = #tpu.dot_dimension_numbers<[1], [0], [0], [1], [0, 0, 1, 1], [], []>} : vector<2x4xf32>, vector<4x32xf32>, vector<2x32xf32> -> vector<2x32xf32>
    %c0_104 = arith.constant 0 : index
    %c0_105 = arith.constant 0 : index
    %c208 = arith.constant 208 : index
    %117 = vector.load %arg1[%c0_104, %c0_105, %c208] : memref<2x4x256xf32, #tpu.memory_space<vmem>>, vector<2x4x16xf32>
    %cst_106 = arith.constant dense<0.000000e+00> : vector<2x4xf32>
    %118 = vector.multi_reduction <add>, %117, %cst_106 [2] : vector<2x4x16xf32> to vector<2x4xf32>
    %cst_107 = arith.constant 1.600000e+01 : f32
    %119 = vector.broadcast %cst_107 : f32 to vector<2x4xf32>
    %120 = arith.divf %118, %119 : vector<2x4xf32>
    %cst_108 = arith.constant dense<0xFF800000> : vector<2x4xf32>
    %121 = vector.multi_reduction <maximumf>, %117, %cst_108 [2] : vector<2x4x16xf32> to vector<2x4xf32>
    %122 = arith.addf %120, %121 : vector<2x4xf32>
    %c13 = arith.constant 13 : index
    %c0_109 = arith.constant 0 : index
    %c0_110 = arith.constant 0 : index
    %123 = vector.load %arg2[%c13, %c0_109, %c0_110] : memref<16x4x32xf32, #tpu.memory_space<vmem>>, vector<1x4x32xf32>
    %124 = vector.shape_cast %123 : vector<1x4x32xf32> to vector<4x32xf32>
    %cst_111 = arith.constant dense<0.000000e+00> : vector<2x32xf32>
    %125 = tpu.matmul %122, %124, %cst_111 {dimension_numbers = #tpu.dot_dimension_numbers<[1], [0], [0], [1], [0, 0, 1, 1], [], []>} : vector<2x4xf32>, vector<4x32xf32>, vector<2x32xf32> -> vector<2x32xf32>
    %c0_112 = arith.constant 0 : index
    %c0_113 = arith.constant 0 : index
    %c224 = arith.constant 224 : index
    %126 = vector.load %arg1[%c0_112, %c0_113, %c224] : memref<2x4x256xf32, #tpu.memory_space<vmem>>, vector<2x4x16xf32>
    %cst_114 = arith.constant dense<0.000000e+00> : vector<2x4xf32>
    %127 = vector.multi_reduction <add>, %126, %cst_114 [2] : vector<2x4x16xf32> to vector<2x4xf32>
    %cst_115 = arith.constant 1.600000e+01 : f32
    %128 = vector.broadcast %cst_115 : f32 to vector<2x4xf32>
    %129 = arith.divf %127, %128 : vector<2x4xf32>
    %cst_116 = arith.constant dense<0xFF800000> : vector<2x4xf32>
    %130 = vector.multi_reduction <maximumf>, %126, %cst_116 [2] : vector<2x4x16xf32> to vector<2x4xf32>
    %131 = arith.addf %129, %130 : vector<2x4xf32>
    %c14 = arith.constant 14 : index
    %c0_117 = arith.constant 0 : index
    %c0_118 = arith.constant 0 : index
    %132 = vector.load %arg2[%c14, %c0_117, %c0_118] : memref<16x4x32xf32, #tpu.memory_space<vmem>>, vector<1x4x32xf32>
    %133 = vector.shape_cast %132 : vector<1x4x32xf32> to vector<4x32xf32>
    %cst_119 = arith.constant dense<0.000000e+00> : vector<2x32xf32>
    %134 = tpu.matmul %131, %133, %cst_119 {dimension_numbers = #tpu.dot_dimension_numbers<[1], [0], [0], [1], [0, 0, 1, 1], [], []>} : vector<2x4xf32>, vector<4x32xf32>, vector<2x32xf32> -> vector<2x32xf32>
    %c0_120 = arith.constant 0 : index
    %c0_121 = arith.constant 0 : index
    %c240 = arith.constant 240 : index
    %135 = vector.load %arg1[%c0_120, %c0_121, %c240] : memref<2x4x256xf32, #tpu.memory_space<vmem>>, vector<2x4x16xf32>
    %cst_122 = arith.constant dense<0.000000e+00> : vector<2x4xf32>
    %136 = vector.multi_reduction <add>, %135, %cst_122 [2] : vector<2x4x16xf32> to vector<2x4xf32>
    %cst_123 = arith.constant 1.600000e+01 : f32
    %137 = vector.broadcast %cst_123 : f32 to vector<2x4xf32>
    %138 = arith.divf %136, %137 : vector<2x4xf32>
    %cst_124 = arith.constant dense<0xFF800000> : vector<2x4xf32>
    %139 = vector.multi_reduction <maximumf>, %135, %cst_124 [2] : vector<2x4x16xf32> to vector<2x4xf32>
    %140 = arith.addf %138, %139 : vector<2x4xf32>
    %c15 = arith.constant 15 : index
    %c0_125 = arith.constant 0 : index
    %c0_126 = arith.constant 0 : index
    %141 = vector.load %arg2[%c15, %c0_125, %c0_126] : memref<16x4x32xf32, #tpu.memory_space<vmem>>, vector<1x4x32xf32>
    %142 = vector.shape_cast %141 : vector<1x4x32xf32> to vector<4x32xf32>
    %cst_127 = arith.constant dense<0.000000e+00> : vector<2x32xf32>
    %143 = tpu.matmul %140, %142, %cst_127 {dimension_numbers = #tpu.dot_dimension_numbers<[1], [0], [0], [1], [0, 0, 1, 1], [], []>} : vector<2x4xf32>, vector<4x32xf32>, vector<2x32xf32> -> vector<2x32xf32>
    %144 = tpu.concatenate %8, %17, %26, %35, %44, %53, %62, %71, %80, %89, %98, %107, %116, %125, %134, %143 in 1 : vector<2x32xf32>, vector<2x32xf32>, vector<2x32xf32>, vector<2x32xf32>, vector<2x32xf32>, vector<2x32xf32>, vector<2x32xf32>, vector<2x32xf32>, vector<2x32xf32>, vector<2x32xf32>, vector<2x32xf32>, vector<2x32xf32>, vector<2x32xf32>, vector<2x32xf32>, vector<2x32xf32>, vector<2x32xf32> -> vector<2x512xf32>
    %c0_128 = arith.constant 0 : index
    %c0_129 = arith.constant 0 : index
    %145 = vector.load %arg3[%c0_128, %c0_129] : memref<2x512xf32, #tpu.memory_space<vmem>>, vector<2x512xf32>
    tpu.vector_store %arg3[%c0_128, %c0_129], %144 {strides = array<i32>} : memref<2x512xf32, #tpu.memory_space<vmem>>, vector<2x512xf32>,
    return
  }
  func.func @transform_0(%arg0: i32) -> (i32, i32, i32) {
    %c0_i32 = arith.constant 0 : i32
    %c0_i32_0 = arith.constant 0 : i32
    %c0_i32_1 = arith.constant 0 : i32
    return %arg0, %c0_i32, %c0_i32_0 : i32, i32, i32
  }
  func.func @transform_1(%arg0: i32) -> (i32, i32, i32) {
    %c0_i32 = arith.constant 0 : i32
    %c0_i32_0 = arith.constant 0 : i32
    %c0_i32_1 = arith.constant 0 : i32
    %c0_i32_2 = arith.constant 0 : i32
    return %c0_i32, %c0_i32_0, %c0_i32_1 : i32, i32, i32
  }
  func.func @transform_2(%arg0: i32) -> (i32, i32) {
    %c0_i32 = arith.constant 0 : i32
    %c0_i32_0 = arith.constant 0 : i32
    return %arg0, %c0_i32 : i32, i32
  }
}

</mosaic_0001>

<llo_original>
// kernel: tpu_custom_call.1
$region0: #{tpu_custom_call.1}
  #allocation0 [shape = 'u32[]', space=smem, size = 0x4, offset = 0x4, fixed_abs, tag = 'smem constant byte address 0x4 - core index']
  #allocation1 [shape = 'u32[144,128]{1,0:T(1,128)}', space=vmem, size = 0x12000, scoped, tag = 'internal scratch']
  %s0 = inlined_call_operand.hbm [shape: f32[2,4,256], index: 0, kind: input, shape index: {}]
  %s1 = inlined_call_operand.hbm [shape: f32[16,4,32], index: 1, kind: input, shape index: {}]
  %s2 = inlined_call_operand.hbm [shape: f32[2,512], index: 2, kind: output, shape index: {}]
  %s3 = sld [smem:[#allocation0]]
  $region26: #{tpu_custom_call.1} parent=0
    _
  %s5 = ssub.s32 1, %s3
  %s6 = scalar_select 0, %s5, %s3
  $region1: #{tpu_custom_call.1} parent=0
    #allocation2 [shape = 'u8[8192]{0}', space=vmem, size = 0x2000, scoped, tag = 'input window, operand 0, single buffered']
    #allocation3 [shape = 's32[1]{0}', space=sflag, size = 0x4, scoped, tag = 'scoped memory for tpu_custom_call.1']
    #allocation4 [shape = 's32[1]{0}', space=sflag, size = 0x4, scoped, tag = 'scoped memory for tpu_custom_call.1']
    #allocation5 [shape = 'u8[32768]{0}', space=vmem, size = 0x8000, scoped, tag = 'input window, operand 1, single buffered']
    #allocation6 [shape = 's32[1]{0}', space=sflag, size = 0x4, scoped, tag = 'scoped memory for tpu_custom_call.1']
    #allocation7 [shape = 'u8[4096]{0}', space=vmem, size = 0x1000, scoped, tag = 'output window, operand 0, single buffered']
    %7 = vsyncpa [#allocation3], 0
    %8 = vsyncpa [#allocation6], 0
    %9 = vsyncpa [#allocation4], 0
    // Predicated region
    $region2: #{tpu_custom_call.1} parent=1 // pred_check
      _
    $region3: #{tpu_custom_call.1} parent=1 // pred_check_branch
      %11 = sbr.rel (0) target = $region5
    $region4: #{tpu_custom_call.1} parent=1 // pred_region
      %s13 = ssub.s32 256, 256
      %14 = vsyncadd [#allocation3], %s13
      %s15 = sshll.u32 [#allocation2], 4
      %s16 = int_to_ptr.vmem [resolvable:$true] %s15
      %21 = dma.hbm_to_vmem [thread:$0]  %s0, 256, %s16, [#allocation3], 128, 128, 8
    $region5: #{tpu_custom_call.1} parent=1 // pred_fallthru
      _
    // Predicated region
    $region6: #{tpu_custom_call.1} parent=1 // pred_check
      _
    $region7: #{tpu_custom_call.1} parent=1 // pred_check_branch
      %23 = sbr.rel (0) target = $region9
    $region8: #{tpu_custom_call.1} parent=1 // pred_region
      %s25 = ssub.s32 1024, 1024
      %26 = vsyncadd [#allocation6], %s25
      %s27 = sshll.u32 [#allocation5], 4
      %s28 = int_to_ptr.vmem [resolvable:$true] %s27
      %33 = dma.hbm_to_vmem [thread:$0]  %s1, 1024, %s28, [#allocation6], 64, 64, 4
    $region9: #{tpu_custom_call.1} parent=1 // pred_fallthru
      _
    // Predicated region
    $region10: #{tpu_custom_call.1} parent=1 // pred_check
      _
    $region11: #{tpu_custom_call.1} parent=1 // pred_check_branch
      %35 = sbr.rel (0) target = $region13
    $region12: #{tpu_custom_call.1} parent=1 // pred_region
      %36 = dma.done [#allocation3], 256
    $region13: #{tpu_custom_call.1} parent=1 // pred_fallthru
      _
    // Predicated region
    $region14: #{tpu_custom_call.1} parent=1 // pred_check
      _
    $region15: #{tpu_custom_call.1} parent=1 // pred_check_branch
      %38 = sbr.rel (0) target = $region17
    $region16: #{tpu_custom_call.1} parent=1 // pred_region
      %39 = dma.done [#allocation6], 1024
    $region17: #{tpu_custom_call.1} parent=1 // pred_fallthru
      _
    %v40 = vld [vmem:[#allocation2] sm:$0xf]
    %v41 = vld [vmem:[#allocation2 + $0x8] sm:$0xf]
    %vm42 = vcmask 125952
    %v43 = vsel %vm42, %v40, 0.0
    %44 = vadd.xlane.f32.xlu0 %v43
    %v45 = vpop.xlane.xlu0 %44
    %v46 = vsel %vm42, %v41, 0.0
    %47 = vadd.xlane.f32.xlu0 %v46
    %v48 = vpop.xlane.xlu0 %47
    %v49 = vrcp.pop 16.0
    %v50 = vmul.f32 %v45, %v49
    %v51 = vmul.f32 %v48, %v49
    %v52 = vsel %vm42, %v40, -inf
    %53 = vmax.xlane.f32.xlu0 %v52
    %v54 = vpop.xlane.xlu0 %53
    %v55 = vsel %vm42, %v41, -inf
    %56 = vmax.xlane.f32.xlu0 %v55
    %v57 = vpop.xlane.xlu0 %56
    %v58 = vadd.f32 %v50, %v54
    %v59 = vadd.f32 %v51, %v57
    %v60 = vld [vmem:[#allocation5] sm:$0xf]
    %v63 = vlaneseq
    %v64 = vand.u32 %v63, 127
    %v65 = vlaneseq
    %v66 = vshrl.u32 %v65, 7
    %v67 = vsub.s32 %v64, %v66
    %v68 = vrot.slane %v58, %v67
    %v69 = vlaneseq
    %v70 = vshrl.u32 %v69, 7
    %v71 = vsub.s32 %v64, %v70
    %v72 = vrot.slane %v59, %v71
    %vm73 = vcmask 1041409
    %v74 = vsel %vm73, %v72, %v68
    %vm75 = vcmask 31744
    %v76 = vsel %vm75, %v74, 0
    %vm78 = vcmask 1043456
    %v80 = vsel %vm78, %v60, 0
    %82 = vmatprep.subr.mxu0 0.0
    %83 = vmatpush1.msra.mxu0 0.0
    %84 = vmatprep.subr.mxu0 0.0
    %85 = vmatpush1.msra.mxu0 0.0
    %86 = vmatprep.subr.mxu0 0.0
    %87 = vmatpush1.msra.mxu0 0.0
    %88 = vmatprep.subr.mxu0 0.0
    %89 = vmatpush1.msra.mxu0 0.0
    %90 = vmatprep.subr.mxu0 0.0
    %91 = vmatpush1.msra.mxu0 0.0
    %92 = vmatprep.subr.mxu0 0.0
    %93 = vmatpush1.msra.mxu0 0.0
    %94 = vmatprep.subr.mxu0 0.0
    %95 = vmatpush1.msra.mxu0 0.0
    %96 = vmatprep.subr.mxu0 0.0
    %97 = vmatpush1.msra.mxu0 0.0
    %98 = vmatprep.subr.mxu0 0.0
    %99 = vmatpush1.msra.mxu0 0.0
    %100 = vmatprep.subr.mxu0 0.0
    %101 = vmatpush1.msra.mxu0 0.0
    %102 = vmatprep.subr.mxu0 0.0
    %103 = vmatpush1.msra.mxu0 0.0
    %104 = vmatprep.subr.mxu0 0.0
    %105 = vmatpush1.msra.mxu0 0.0
    %106 = vmatprep.subr.mxu0 0.0
    %107 = vmatpush1.msra.mxu0 0.0
    %108 = vmatprep.subr.mxu0 0.0
    %109 = vmatpush1.msra.mxu0 0.0
    %110 = vmatprep.subr.mxu0 0.0
    %111 = vmatpush1.msra.mxu0 0.0
    %112 = vmatprep.subr.mxu0 0.0
    %113 = vmatpush1.msra.mxu0 %v80
    %114 = vmatprep.subr.mxu0 0.0
    %115 = vmatpush2.msra.mxu0 0.0
    %116 = vmatprep.subr.mxu0 0.0
    %117 = vmatpush2.msra.mxu0 0.0
    %118 = vmatprep.subr.mxu0 0.0
    %119 = vmatpush2.msra.mxu0 0.0
    %120 = vmatprep.subr.mxu0 0.0
    %121 = vmatpush2.msra.mxu0 0.0
    %122 = vmatprep.subr.mxu0 0.0
    %123 = vmatpush2.msra.mxu0 0.0
    %124 = vmatprep.subr.mxu0 0.0
    %125 = vmatpush2.msra.mxu0 0.0
    %126 = vmatprep.subr.mxu0 0.0
    %127 = vmatpush2.msra.mxu0 0.0
    %128 = vmatprep.subr.mxu0 0.0
    %129 = vmatpush2.msra.mxu0 0.0
    %130 = vmatprep.subr.mxu0 0.0
    %131 = vmatpush2.msra.mxu0 0.0
    %132 = vmatprep.subr.mxu0 0.0
    %133 = vmatpush2.msra.mxu0 0.0
    %134 = vmatprep.subr.mxu0 0.0
    %135 = vmatpush2.msra.mxu0 0.0
    %136 = vmatprep.subr.mxu0 0.0
    %137 = vmatpush2.msra.mxu0 0.0
    %138 = vmatprep.subr.mxu0 0.0
    %139 = vmatpush2.msra.mxu0 0.0
    %140 = vmatprep.subr.mxu0 0.0
    %141 = vmatpush2.msra.mxu0 0.0
    %142 = vmatprep.subr.mxu0 0.0
    %143 = vmatpush2.msra.mxu0 0.0
    %144 = vmatprep.subr.mxu0 0.0
    %145 = vmatpush2.msra.mxu0 0.0
    %146 = vmatprep.mubr.f32.mxu0 0.0
    %147 = vmatmul.mubr.f32.gmra.mxu0 %v76
    %v148 = vpop.f32.mrf.mxu0
    %v149 = vadd.f32 0.0, %v148
    %v150 = vpop.f32.mrf.mxu0
    %151 = vdwg.mxu0
    %154 = vrot.lane.b32.xlu0 %v40, 112
    %v155 = vpop.permute.xlu0 %154
    %156 = vrot.lane.b32.xlu0 %v41, 112
    %v157 = vpop.permute.xlu0 %156
    %v160 = vsel %vm42, %v155, 0.0
    %161 = vadd.xlane.f32.xlu0 %v160
    %v162 = vpop.xlane.xlu0 %161
    %v163 = vsel %vm42, %v157, 0.0
    %164 = vadd.xlane.f32.xlu0 %v163
    %v165 = vpop.xlane.xlu0 %164
    %v166 = vmul.f32 %v162, %v49
    %v167 = vmul.f32 %v165, %v49
    %vm168 = vcmask 257152
    %v169 = vsel %vm168, %v40, -inf
    %170 = vmax.xlane.f32.xlu0 %v169
    %v171 = vpop.xlane.xlu0 %170
    %v172 = vsel %vm168, %v41, -inf
    %173 = vmax.xlane.f32.xlu0 %v172
    %v174 = vpop.xlane.xlu0 %173
    %v175 = vadd.f32 %v166, %v171
    %v176 = vadd.f32 %v167, %v174
    %s177 = scalar_lea.vmem [#allocation5], 4
    %v178 = vld [vmem:[%s177] sm:$0xf]
    %v181 = vlaneseq
    %v182 = vshrl.u32 %v181, 7
    %v183 = vsub.s32 %v64, %v182
    %v184 = vrot.slane %v175, %v183
    %v185 = vlaneseq
    %v186 = vshrl.u32 %v185, 7
    %v187 = vsub.s32 %v64, %v186
    %v188 = vrot.slane %v176, %v187
    %v189 = vsel %vm73, %v188, %v184
    %v190 = vsel %vm75, %v189, 0
    %v193 = vsel %vm78, %v178, 0
    %195 = vmatprep.subr.mxu0 0.0
    %196 = vmatpush1.msra.mxu0 0.0
    %197 = vmatprep.subr.mxu0 0.0
    %198 = vmatpush1.msra.mxu0 0.0
    %199 = vmatprep.subr.mxu0 0.0
    %200 = vmatpush1.msra.mxu0 0.0
    %201 = vmatprep.subr.mxu0 0.0
    %202 = vmatpush1.msra.mxu0 0.0
    %203 = vmatprep.subr.mxu0 0.0
    %204 = vmatpush1.msra.mxu0 0.0
    %205 = vmatprep.subr.mxu0 0.0
    %206 = vmatpush1.msra.mxu0 0.0
    %207 = vmatprep.subr.mxu0 0.0
    %208 = vmatpush1.msra.mxu0 0.0
    %209 = vmatprep.subr.mxu0 0.0
    %210 = vmatpush1.msra.mxu0 0.0
    %211 = vmatprep.subr.mxu0 0.0
    %212 = vmatpush1.msra.mxu0 0.0
    %213 = vmatprep.subr.mxu0 0.0
    %214 = vmatpush1.msra.mxu0 0.0
    %215 = vmatprep.subr.mxu0 0.0
    %216 = vmatpush1.msra.mxu0 0.0
    %217 = vmatprep.subr.mxu0 0.0
    %218 = vmatpush1.msra.mxu0 0.0
    %219 = vmatprep.subr.mxu0 0.0
    %220 = vmatpush1.msra.mxu0 0.0
    %221 = vmatprep.subr.mxu0 0.0
    %222 = vmatpush1.msra.mxu0 0.0
    %223 = vmatprep.subr.mxu0 0.0
    %224 = vmatpush1.msra.mxu0 0.0
    %225 = vmatprep.subr.mxu0 0.0
    %226 = vmatpush1.msra.mxu0 %v193
    %227 = vmatprep.subr.mxu0 0.0
    %228 = vmatpush2.msra.mxu0 0.0
    %229 = vmatprep.subr.mxu0 0.0
    %230 = vmatpush2.msra.mxu0 0.0
    %231 = vmatprep.subr.mxu0 0.0
    %232 = vmatpush2.msra.mxu0 0.0
    %233 = vmatprep.subr.mxu0 0.0
    %234 = vmatpush2.msra.mxu0 0.0
    %235 = vmatprep.subr.mxu0 0.0
    %236 = vmatpush2.msra.mxu0 0.0
    %237 = vmatprep.subr.mxu0 0.0
    %238 = vmatpush2.msra.mxu0 0.0
    %239 = vmatprep.subr.mxu0 0.0
    %240 = vmatpush2.msra.mxu0 0.0
    %241 = vmatprep.subr.mxu0 0.0
    %242 = vmatpush2.msra.mxu0 0.0
    %243 = vmatprep.subr.mxu0 0.0
    %244 = vmatpush2.msra.mxu0 0.0
    %245 = vmatprep.subr.mxu0 0.0
    %246 = vmatpush2.msra.mxu0 0.0
    %247 = vmatprep.subr.mxu0 0.0
    %248 = vmatpush2.msra.mxu0 0.0
    %249 = vmatprep.subr.mxu0 0.0
    %250 = vmatpush2.msra.mxu0 0.0
    %251 = vmatprep.subr.mxu0 0.0
    %252 = vmatpush2.msra.mxu0 0.0
    %253 = vmatprep.subr.mxu0 0.0
    %254 = vmatpush2.msra.mxu0 0.0
    %255 = vmatprep.subr.mxu0 0.0
    %256 = vmatpush2.msra.mxu0 0.0
    %257 = vmatprep.subr.mxu0 0.0
    %258 = vmatpush2.msra.mxu0 0.0
    %259 = vmatprep.mubr.f32.mxu0 0.0
    %260 = vmatmul.mubr.f32.gmra.mxu0 %v190
    %v261 = vpop.f32.mrf.mxu0
    %v262 = vadd.f32 0.0, %v261
    %v263 = vpop.f32.mrf.mxu0
    %264 = vdwg.mxu0
    %v265 = vld [vmem:[#allocation2] sm:$0xf]
    %v266 = vld [vmem:[#allocation2 + $0x8] sm:$0xf]
    %269 = vrot.lane.b32.xlu0 %v265, 96
    %v270 = vpop.permute.xlu0 %269
    %271 = vrot.lane.b32.xlu0 %v266, 96
    %v272 = vpop.permute.xlu0 %271
    %v275 = vsel %vm42, %v270, 0.0
    %276 = vadd.xlane.f32.xlu0 %v275
    %v277 = vpop.xlane.xlu0 %276
    %v278 = vsel %vm42, %v272, 0.0
    %279 = vadd.xlane.f32.xlu0 %v278
    %v280 = vpop.xlane.xlu0 %279
    %v281 = vmul.f32 %v277, %v49
    %v282 = vmul.f32 %v280, %v49
    %vm283 = vcmask 388352
    %v284 = vsel %vm283, %v265, -inf
    %285 = vmax.xlane.f32.xlu0 %v284
    %v286 = vpop.xlane.xlu0 %285
    %v287 = vsel %vm283, %v266, -inf
    %288 = vmax.xlane.f32.xlu0 %v287
    %v289 = vpop.xlane.xlu0 %288
    %v290 = vadd.f32 %v281, %v286
    %v291 = vadd.f32 %v282, %v289
    %s292 = scalar_lea.vmem [#allocation5], 8
    %v293 = vld [vmem:[%s292] sm:$0xf]
    %v296 = vlaneseq
    %v297 = vshrl.u32 %v296, 7
    %v298 = vsub.s32 %v64, %v297
    %v299 = vrot.slane %v290, %v298
    %v300 = vlaneseq
    %v301 = vshrl.u32 %v300, 7
    %v302 = vsub.s32 %v64, %v301
    %v303 = vrot.slane %v291, %v302
    %v304 = vsel %vm73, %v303, %v299
    %v305 = vsel %vm75, %v304, 0
    %v308 = vsel %vm78, %v293, 0
    %310 = vmatprep.subr.mxu0 0.0
    %311 = vmatpush1.msra.mxu0 0.0
    %312 = vmatprep.subr.mxu0 0.0
    %313 = vmatpush1.msra.mxu0 0.0
    %314 = vmatprep.subr.mxu0 0.0
    %315 = vmatpush1.msra.mxu0 0.0
    %316 = vmatprep.subr.mxu0 0.0
    %317 = vmatpush1.msra.mxu0 0.0
    %318 = vmatprep.subr.mxu0 0.0
    %319 = vmatpush1.msra.mxu0 0.0
    %320 = vmatprep.subr.mxu0 0.0
    %321 = vmatpush1.msra.mxu0 0.0
    %322 = vmatprep.subr.mxu0 0.0
    %323 = vmatpush1.msra.mxu0 0.0
    %324 = vmatprep.subr.mxu0 0.0
    %325 = vmatpush1.msra.mxu0 0.0
    %326 = vmatprep.subr.mxu0 0.0
    %327 = vmatpush1.msra.mxu0 0.0
    %328 = vmatprep.subr.mxu0 0.0
    %329 = vmatpush1.msra.mxu0 0.0
    %330 = vmatprep.subr.mxu0 0.0
    %331 = vmatpush1.msra.mxu0 0.0
    %332 = vmatprep.subr.mxu0 0.0
    %333 = vmatpush1.msra.mxu0 0.0
    %334 = vmatprep.subr.mxu0 0.0
    %335 = vmatpush1.msra.mxu0 0.0
    %336 = vmatprep.subr.mxu0 0.0
    %337 = vmatpush1.msra.mxu0 0.0
    %338 = vmatprep.subr.mxu0 0.0
    %339 = vmatpush1.msra.mxu0 0.0
    %340 = vmatprep.subr.mxu0 0.0
    %341 = vmatpush1.msra.mxu0 %v308
    %342 = vmatprep.subr.mxu0 0.0
    %343 = vmatpush2.msra.mxu0 0.0
    %344 = vmatprep.subr.mxu0 0.0
    %345 = vmatpush2.msra.mxu0 0.0
    %346 = vmatprep.subr.mxu0 0.0
    %347 = vmatpush2.msra.mxu0 0.0
    %348 = vmatprep.subr.mxu0 0.0
    %349 = vmatpush2.msra.mxu0 0.0
    %350 = vmatprep.subr.mxu0 0.0
    %351 = vmatpush2.msra.mxu0 0.0
    %352 = vmatprep.subr.mxu0 0.0
    %353 = vmatpush2.msra.mxu0 0.0
    %354 = vmatprep.subr.mxu0 0.0
    %355 = vmatpush2.msra.mxu0 0.0
    %356 = vmatprep.subr.mxu0 0.0
    %357 = vmatpush2.msra.mxu0 0.0
    %358 = vmatprep.subr.mxu0 0.0
    %359 = vmatpush2.msra.mxu0 0.0
    %360 = vmatprep.subr.mxu0 0.0
    %361 = vmatpush2.msra.mxu0 0.0
    %362 = vmatprep.subr.mxu0 0.0
    %363 = vmatpush2.msra.mxu0 0.0
    %364 = vmatprep.subr.mxu0 0.0
    %365 = vmatpush2.msra.mxu0 0.0
    %366 = vmatprep.subr.mxu0 0.0
    %367 = vmatpush2.msra.mxu0 0.0
    %368 = vmatprep.subr.mxu0 0.0
    %369 = vmatpush2.msra.mxu0 0.0
    %370 = vmatprep.subr.mxu0 0.0
    %371 = vmatpush2.msra.mxu0 0.0
    %372 = vmatprep.subr.mxu0 0.0
    %373 = vmatpush2.msra.mxu0 0.0
    %374 = vmatprep.mubr.f32.mxu0 0.0
    %375 = vmatmul.mubr.f32.gmra.mxu0 %v305
    %v376 = vpop.f32.mrf.mxu0
    %v377 = vadd.f32 0.0, %v376
    %v378 = vpop.f32.mrf.mxu0
    %379 = vdwg.mxu0
    %v380 = vld [vmem:[#allocation2] sm:$0xf]
    %v381 = vld [vmem:[#allocation2 + $0x8] sm:$0xf]
    %384 = vrot.lane.b32.xlu0 %v380, 80
    %v385 = vpop.permute.xlu0 %384
    %386 = vrot.lane.b32.xlu0 %v381, 80
    %v387 = vpop.permute.xlu0 %386
    %v390 = vsel %vm42, %v385, 0.0
    %391 = vadd.xlane.f32.xlu0 %v390
    %v392 = vpop.xlane.xlu0 %391
    %v393 = vsel %vm42, %v387, 0.0
    %394 = vadd.xlane.f32.xlu0 %v393
    %v395 = vpop.xlane.xlu0 %394
    %v396 = vmul.f32 %v392, %v49
    %v397 = vmul.f32 %v395, %v49
    %vm398 = vcmask 519552
    %v399 = vsel %vm398, %v380, -inf
    %400 = vmax.xlane.f32.xlu0 %v399
    %v401 = vpop.xlane.xlu0 %400
    %v402 = vsel %vm398, %v381, -inf
    %403 = vmax.xlane.f32.xlu0 %v402
    %v404 = vpop.xlane.xlu0 %403
    %v405 = vadd.f32 %v396, %v401
    %v406 = vadd.f32 %v397, %v404
    %s407 = scalar_lea.vmem [#allocation5], 12
    %v408 = vld [vmem:[%s407] sm:$0xf]
    %v411 = vlaneseq
    %v412 = vshrl.u32 %v411, 7
    %v413 = vsub.s32 %v64, %v412
    %v414 = vrot.slane %v405, %v413
    %v415 = vlaneseq
    %v416 = vshrl.u32 %v415, 7
    %v417 = vsub.s32 %v64, %v416
    %v418 = vrot.slane %v406, %v417
    %v419 = vsel %vm73, %v418, %v414
    %v420 = vsel %vm75, %v419, 0
    %v423 = vsel %vm78, %v408, 0
    %425 = vmatprep.subr.mxu0 0.0
    %426 = vmatpush1.msra.mxu0 0.0
    %427 = vmatprep.subr.mxu0 0.0
    %428 = vmatpush1.msra.mxu0 0.0
    %429 = vmatprep.subr.mxu0 0.0
    %430 = vmatpush1.msra.mxu0 0.0
    %431 = vmatprep.subr.mxu0 0.0
    %432 = vmatpush1.msra.mxu0 0.0
    %433 = vmatprep.subr.mxu0 0.0
    %434 = vmatpush1.msra.mxu0 0.0
    %435 = vmatprep.subr.mxu0 0.0
    %436 = vmatpush1.msra.mxu0 0.0
    %437 = vmatprep.subr.mxu0 0.0
    %438 = vmatpush1.msra.mxu0 0.0
    %439 = vmatprep.subr.mxu0 0.0
    %440 = vmatpush1.msra.mxu0 0.0
    %441 = vmatprep.subr.mxu0 0.0
    %442 = vmatpush1.msra.mxu0 0.0
    %443 = vmatprep.subr.mxu0 0.0
    %444 = vmatpush1.msra.mxu0 0.0
    %445 = vmatprep.subr.mxu0 0.0
    %446 = vmatpush1.msra.mxu0 0.0
    %447 = vmatprep.subr.mxu0 0.0
    %448 = vmatpush1.msra.mxu0 0.0
    %449 = vmatprep.subr.mxu0 0.0
    %450 = vmatpush1.msra.mxu0 0.0
    %451 = vmatprep.subr.mxu0 0.0
    %452 = vmatpush1.msra.mxu0 0.0
    %453 = vmatprep.subr.mxu0 0.0
    %454 = vmatpush1.msra.mxu0 0.0
    %455 = vmatprep.subr.mxu0 0.0
    %456 = vmatpush1.msra.mxu0 %v423
    %457 = vmatprep.subr.mxu0 0.0
    %458 = vmatpush2.msra.mxu0 0.0
    %459 = vmatprep.subr.mxu0 0.0
    %460 = vmatpush2.msra.mxu0 0.0
    %461 = vmatprep.subr.mxu0 0.0
    %462 = vmatpush2.msra.mxu0 0.0
    %463 = vmatprep.subr.mxu0 0.0
    %464 = vmatpush2.msra.mxu0 0.0
    %465 = vmatprep.subr.mxu0 0.0
    %466 = vmatpush2.msra.mxu0 0.0
    %467 = vmatprep.subr.mxu0 0.0
    %468 = vmatpush2.msra.mxu0 0.0
    %469 = vmatprep.subr.mxu0 0.0
    %470 = vmatpush2.msra.mxu0 0.0
    %471 = vmatprep.subr.mxu0 0.0
    %472 = vmatpush2.msra.mxu0 0.0
    %473 = vmatprep.subr.mxu0 0.0
    %474 = vmatpush2.msra.mxu0 0.0
    %475 = vmatprep.subr.mxu0 0.0
    %476 = vmatpush2.msra.mxu0 0.0
    %477 = vmatprep.subr.mxu0 0.0
    %478 = vmatpush2.msra.mxu0 0.0
    %479 = vmatprep.subr.mxu0 0.0
    %480 = vmatpush2.msra.mxu0 0.0
    %481 = vmatprep.subr.mxu0 0.0
    %482 = vmatpush2.msra.mxu0 0.0
    %483 = vmatprep.subr.mxu0 0.0
    %484 = vmatpush2.msra.mxu0 0.0
    %485 = vmatprep.subr.mxu0 0.0
    %486 = vmatpush2.msra.mxu0 0.0
    %487 = vmatprep.subr.mxu0 0.0
    %488 = vmatpush2.msra.mxu0 0.0
    %489 = vmatprep.mubr.f32.mxu0 0.0
    %490 = vmatmul.mubr.f32.gmra.mxu0 %v420
    %v491 = vpop.f32.mrf.mxu0
    %v492 = vadd.f32 0.0, %v491
    %v493 = vpop.f32.mrf.mxu0
    %494 = vdwg.mxu0
    %v495 = vld [vmem:[#allocation2] sm:$0xf]
    %v496 = vld [vmem:[#allocation2 + $0x8] sm:$0xf]
    %499 = vrot.lane.b32.xlu0 %v495, 64
    %v500 = vpop.permute.xlu0 %499
    %501 = vrot.lane.b32.xlu0 %v496, 64
    %v502 = vpop.permute.xlu0 %501
    %v505 = vsel %vm42, %v500, 0.0
    %506 = vadd.xlane.f32.xlu0 %v505
    %v507 = vpop.xlane.xlu0 %506
    %v508 = vsel %vm42, %v502, 0.0
    %509 = vadd.xlane.f32.xlu0 %v508
    %v510 = vpop.xlane.xlu0 %509
    %v511 = vmul.f32 %v507, %v49
    %v512 = vmul.f32 %v510, %v49
    %vm513 = vcmask 650752
    %v514 = vsel %vm513, %v495, -inf
    %515 = vmax.xlane.f32.xlu0 %v514
    %v516 = vpop.xlane.xlu0 %515
    %v517 = vsel %vm513, %v496, -inf
    %518 = vmax.xlane.f32.xlu0 %v517
    %v519 = vpop.xlane.xlu0 %518
    %v520 = vadd.f32 %v511, %v516
    %v521 = vadd.f32 %v512, %v519
    %s522 = scalar_lea.vmem [#allocation5], 16
    %v523 = vld [vmem:[%s522] sm:$0xf]
    %v526 = vlaneseq
    %v527 = vshrl.u32 %v526, 7
    %v528 = vsub.s32 %v64, %v527
    %v529 = vrot.slane %v520, %v528
    %v530 = vlaneseq
    %v531 = vshrl.u32 %v530, 7
    %v532 = vsub.s32 %v64, %v531
    %v533 = vrot.slane %v521, %v532
    %v534 = vsel %vm73, %v533, %v529
    %v535 = vsel %vm75, %v534, 0
    %v538 = vsel %vm78, %v523, 0
    %540 = vmatprep.subr.mxu0 0.0
    %541 = vmatpush1.msra.mxu0 0.0
    %542 = vmatprep.subr.mxu0 0.0
    %543 = vmatpush1.msra.mxu0 0.0
    %544 = vmatprep.subr.mxu0 0.0
    %545 = vmatpush1.msra.mxu0 0.0
    %546 = vmatprep.subr.mxu0 0.0
    %547 = vmatpush1.msra.mxu0 0.0
    %548 = vmatprep.subr.mxu0 0.0
    %549 = vmatpush1.msra.mxu0 0.0
    %550 = vmatprep.subr.mxu0 0.0
    %551 = vmatpush1.msra.mxu0 0.0
    %552 = vmatprep.subr.mxu0 0.0
    %553 = vmatpush1.msra.mxu0 0.0
    %554 = vmatprep.subr.mxu0 0.0
    %555 = vmatpush1.msra.mxu0 0.0
    %556 = vmatprep.subr.mxu0 0.0
    %557 = vmatpush1.msra.mxu0 0.0
    %558 = vmatprep.subr.mxu0 0.0
    %559 = vmatpush1.msra.mxu0 0.0
    %560 = vmatprep.subr.mxu0 0.0
    %561 = vmatpush1.msra.mxu0 0.0
    %562 = vmatprep.subr.mxu0 0.0
    %563 = vmatpush1.msra.mxu0 0.0
    %564 = vmatprep.subr.mxu0 0.0
    %565 = vmatpush1.msra.mxu0 0.0
    %566 = vmatprep.subr.mxu0 0.0
    %567 = vmatpush1.msra.mxu0 0.0
    %568 = vmatprep.subr.mxu0 0.0
    %569 = vmatpush1.msra.mxu0 0.0
    %570 = vmatprep.subr.mxu0 0.0
    %571 = vmatpush1.msra.mxu0 %v538
    %572 = vmatprep.subr.mxu0 0.0
    %573 = vmatpush2.msra.mxu0 0.0
    %574 = vmatprep.subr.mxu0 0.0
    %575 = vmatpush2.msra.mxu0 0.0
    %576 = vmatprep.subr.mxu0 0.0
    %577 = vmatpush2.msra.mxu0 0.0
    %578 = vmatprep.subr.mxu0 0.0
    %579 = vmatpush2.msra.mxu0 0.0
    %580 = vmatprep.subr.mxu0 0.0
    %581 = vmatpush2.msra.mxu0 0.0
    %582 = vmatprep.subr.mxu0 0.0
    %583 = vmatpush2.msra.mxu0 0.0
    %584 = vmatprep.subr.mxu0 0.0
    %585 = vmatpush2.msra.mxu0 0.0
    %586 = vmatprep.subr.mxu0 0.0
    %587 = vmatpush2.msra.mxu0 0.0
    %588 = vmatprep.subr.mxu0 0.0
    %589 = vmatpush2.msra.mxu0 0.0
    %590 = vmatprep.subr.mxu0 0.0
    %591 = vmatpush2.msra.mxu0 0.0
    %592 = vmatprep.subr.mxu0 0.0
    %593 = vmatpush2.msra.mxu0 0.0
    %594 = vmatprep.subr.mxu0 0.0
    %595 = vmatpush2.msra.mxu0 0.0
    %596 = vmatprep.subr.mxu0 0.0
    %597 = vmatpush2.msra.mxu0 0.0
    %598 = vmatprep.subr.mxu0 0.0
    %599 = vmatpush2.msra.mxu0 0.0
    %600 = vmatprep.subr.mxu0 0.0
    %601 = vmatpush2.msra.mxu0 0.0
    %602 = vmatprep.subr.mxu0 0.0
    %603 = vmatpush2.msra.mxu0 0.0
    %604 = vmatprep.mubr.f32.mxu0 0.0
    %605 = vmatmul.mubr.f32.gmra.mxu0 %v535
    %v606 = vpop.f32.mrf.mxu0
    %v607 = vadd.f32 0.0, %v606
    %v608 = vpop.f32.mrf.mxu0
    %609 = vdwg.mxu0
    %v610 = vld [vmem:[#allocation2] sm:$0xf]
    %v611 = vld [vmem:[#allocation2 + $0x8] sm:$0xf]
    %614 = vrot.lane.b32.xlu0 %v610, 48
    %v615 = vpop.permute.xlu0 %614
    %616 = vrot.lane.b32.xlu0 %v611, 48
    %v617 = vpop.permute.xlu0 %616
    %v620 = vsel %vm42, %v615, 0.0
    %621 = vadd.xlane.f32.xlu0 %v620
    %v622 = vpop.xlane.xlu0 %621
    %v623 = vsel %vm42, %v617, 0.0
    %624 = vadd.xlane.f32.xlu0 %v623
    %v625 = vpop.xlane.xlu0 %624
    %v626 = vmul.f32 %v622, %v49
    %v627 = vmul.f32 %v625, %v49
    %vm628 = vcmask 781952
    %v629 = vsel %vm628, %v610, -inf
    %630 = vmax.xlane.f32.xlu0 %v629
    %v631 = vpop.xlane.xlu0 %630
    %v632 = vsel %vm628, %v611, -inf
    %633 = vmax.xlane.f32.xlu0 %v632
    %v634 = vpop.xlane.xlu0 %633
    %v635 = vadd.f32 %v626, %v631
    %v636 = vadd.f32 %v627, %v634
    %s637 = scalar_lea.vmem [#allocation5], 20
    %v638 = vld [vmem:[%s637] sm:$0xf]
    %v641 = vlaneseq
    %v642 = vshrl.u32 %v641, 7
    %v643 = vsub.s32 %v64, %v642
    %v644 = vrot.slane %v635, %v643
    %v645 = vlaneseq
    %v646 = vshrl.u32 %v645, 7
    %v647 = vsub.s32 %v64, %v646
    %v648 = vrot.slane %v636, %v647
    %v649 = vsel %vm73, %v648, %v644
    %v650 = vsel %vm75, %v649, 0
    %v653 = vsel %vm78, %v638, 0
    %655 = vmatprep.subr.mxu0 0.0
    %656 = vmatpush1.msra.mxu0 0.0
    %657 = vmatprep.subr.mxu0 0.0
    %658 = vmatpush1.msra.mxu0 0.0
    %659 = vmatprep.subr.mxu0 0.0
    %660 = vmatpush1.msra.mxu0 0.0
    %661 = vmatprep.subr.mxu0 0.0
    %662 = vmatpush1.msra.mxu0 0.0
    %663 = vmatprep.subr.mxu0 0.0
    %664 = vmatpush1.msra.mxu0 0.0
    %665 = vmatprep.subr.mxu0 0.0
    %666 = vmatpush1.msra.mxu0 0.0
    %667 = vmatprep.subr.mxu0 0.0
    %668 = vmatpush1.msra.mxu0 0.0
    %669 = vmatprep.subr.mxu0 0.0
    %670 = vmatpush1.msra.mxu0 0.0
    %671 = vmatprep.subr.mxu0 0.0
    %672 = vmatpush1.msra.mxu0 0.0
    %673 = vmatprep.subr.mxu0 0.0
    %674 = vmatpush1.msra.mxu0 0.0
    %675 = vmatprep.subr.mxu0 0.0
    %676 = vmatpush1.msra.mxu0 0.0
    %677 = vmatprep.subr.mxu0 0.0
    %678 = vmatpush1.msra.mxu0 0.0
    %679 = vmatprep.subr.mxu0 0.0
    %680 = vmatpush1.msra.mxu0 0.0
    %681 = vmatprep.subr.mxu0 0.0
    %682 = vmatpush1.msra.mxu0 0.0
    %683 = vmatprep.subr.mxu0 0.0
    %684 = vmatpush1.msra.mxu0 0.0
    %685 = vmatprep.subr.mxu0 0.0
    %686 = vmatpush1.msra.mxu0 %v653
    %687 = vmatprep.subr.mxu0 0.0
    %688 = vmatpush2.msra.mxu0 0.0
    %689 = vmatprep.subr.mxu0 0.0
    %690 = vmatpush2.msra.mxu0 0.0
    %691 = vmatprep.subr.mxu0 0.0
    %692 = vmatpush2.msra.mxu0 0.0
    %693 = vmatprep.subr.mxu0 0.0
    %694 = vmatpush2.msra.mxu0 0.0
    %695 = vmatprep.subr.mxu0 0.0
    %696 = vmatpush2.msra.mxu0 0.0
    %697 = vmatprep.subr.mxu0 0.0
    %698 = vmatpush2.msra.mxu0 0.0
    %699 = vmatprep.subr.mxu0 0.0
    %700 = vmatpush2.msra.mxu0 0.0
    %701 = vmatprep.subr.mxu0 0.0
    %702 = vmatpush2.msra.mxu0 0.0
    %703 = vmatprep.subr.mxu0 0.0
    %704 = vmatpush2.msra.mxu0 0.0
    %705 = vmatprep.subr.mxu0 0.0
    %706 = vmatpush2.msra.mxu0 0.0
    %707 = vmatprep.subr.mxu0 0.0
    %708 = vmatpush2.msra.mxu0 0.0
    %709 = vmatprep.subr.mxu0 0.0
    %710 = vmatpush2.msra.mxu0 0.0
    %711 = vmatprep.subr.mxu0 0.0
    %712 = vmatpush2.msra.mxu0 0.0
    %713 = vmatprep.subr.mxu0 0.0
    %714 = vmatpush2.msra.mxu0 0.0
    %715 = vmatprep.subr.mxu0 0.0
    %716 = vmatpush2.msra.mxu0 0.0
    %717 = vmatprep.subr.mxu0 0.0
    %718 = vmatpush2.msra.mxu0 0.0
    %719 = vmatprep.mubr.f32.mxu0 0.0
    %720 = vmatmul.mubr.f32.gmra.mxu0 %v650
    %v721 = vpop.f32.mrf.mxu0
    %v722 = vadd.f32 0.0, %v721
    %v723 = vpop.f32.mrf.mxu0
    %724 = vdwg.mxu0
    %v725 = vld [vmem:[#allocation2] sm:$0xf]
    %v726 = vld [vmem:[#allocation2 + $0x8] sm:$0xf]
    %729 = vrot.lane.b32.xlu0 %v725, 32
    %v730 = vpop.permute.xlu0 %729
    %731 = vrot.lane.b32.xlu0 %v726, 32
    %v732 = vpop.permute.xlu0 %731
    %v735 = vsel %vm42, %v730, 0.0
    %736 = vadd.xlane.f32.xlu0 %v735
    %v737 = vpop.xlane.xlu0 %736
    %v738 = vsel %vm42, %v732, 0.0
    %739 = vadd.xlane.f32.xlu0 %v738
    %v740 = vpop.xlane.xlu0 %739
    %v741 = vmul.f32 %v737, %v49
    %v742 = vmul.f32 %v740, %v49
    %vm743 = vcmask 913152
    %v744 = vsel %vm743, %v725, -inf
    %745 = vmax.xlane.f32.xlu0 %v744
    %v746 = vpop.xlane.xlu0 %745
    %v747 = vsel %vm743, %v726, -inf
    %748 = vmax.xlane.f32.xlu0 %v747
    %v749 = vpop.xlane.xlu0 %748
    %v750 = vadd.f32 %v741, %v746
    %v751 = vadd.f32 %v742, %v749
    %s752 = scalar_lea.vmem [#allocation5], 24
    %v753 = vld [vmem:[%s752] sm:$0xf]
    %v756 = vlaneseq
    %v757 = vshrl.u32 %v756, 7
    %v758 = vsub.s32 %v64, %v757
    %v759 = vrot.slane %v750, %v758
    %v760 = vlaneseq
    %v761 = vshrl.u32 %v760, 7
    %v762 = vsub.s32 %v64, %v761
    %v763 = vrot.slane %v751, %v762
    %v764 = vsel %vm73, %v763, %v759
    %v765 = vsel %vm75, %v764, 0
    %v768 = vsel %vm78, %v753, 0
    %770 = vmatprep.subr.mxu0 0.0
    %771 = vmatpush1.msra.mxu0 0.0
    %772 = vmatprep.subr.mxu0 0.0
    %773 = vmatpush1.msra.mxu0 0.0
    %774 = vmatprep.subr.mxu0 0.0
    %775 = vmatpush1.msra.mxu0 0.0
    %776 = vmatprep.subr.mxu0 0.0
    %777 = vmatpush1.msra.mxu0 0.0
    %778 = vmatprep.subr.mxu0 0.0
    %779 = vmatpush1.msra.mxu0 0.0
    %780 = vmatprep.subr.mxu0 0.0
    %781 = vmatpush1.msra.mxu0 0.0
    %782 = vmatprep.subr.mxu0 0.0
    %783 = vmatpush1.msra.mxu0 0.0
    %784 = vmatprep.subr.mxu0 0.0
    %785 = vmatpush1.msra.mxu0 0.0
    %786 = vmatprep.subr.mxu0 0.0
    %787 = vmatpush1.msra.mxu0 0.0
    %788 = vmatprep.subr.mxu0 0.0
    %789 = vmatpush1.msra.mxu0 0.0
    %790 = vmatprep.subr.mxu0 0.0
    %791 = vmatpush1.msra.mxu0 0.0
    %792 = vmatprep.subr.mxu0 0.0
    %793 = vmatpush1.msra.mxu0 0.0
    %794 = vmatprep.subr.mxu0 0.0
    %795 = vmatpush1.msra.mxu0 0.0
    %796 = vmatprep.subr.mxu0 0.0
    %797 = vmatpush1.msra.mxu0 0.0
    %798 = vmatprep.subr.mxu0 0.0
    %799 = vmatpush1.msra.mxu0 0.0
    %800 = vmatprep.subr.mxu0 0.0
    %801 = vmatpush1.msra.mxu0 %v768
    %802 = vmatprep.subr.mxu0 0.0
    %803 = vmatpush2.msra.mxu0 0.0
    %804 = vmatprep.subr.mxu0 0.0
    %805 = vmatpush2.msra.mxu0 0.0
    %806 = vmatprep.subr.mxu0 0.0
    %807 = vmatpush2.msra.mxu0 0.0
    %808 = vmatprep.subr.mxu0 0.0
    %809 = vmatpush2.msra.mxu0 0.0
    %810 = vmatprep.subr.mxu0 0.0
    %811 = vmatpush2.msra.mxu0 0.0
    %812 = vmatprep.subr.mxu0 0.0
    %813 = vmatpush2.msra.mxu0 0.0
    %814 = vmatprep.subr.mxu0 0.0
    %815 = vmatpush2.msra.mxu0 0.0
    %816 = vmatprep.subr.mxu0 0.0
    %817 = vmatpush2.msra.mxu0 0.0
    %818 = vmatprep.subr.mxu0 0.0
    %819 = vmatpush2.msra.mxu0 0.0
    %820 = vmatprep.subr.mxu0 0.0
    %821 = vmatpush2.msra.mxu0 0.0
    %822 = vmatprep.subr.mxu0 0.0
    %823 = vmatpush2.msra.mxu0 0.0
    %824 = vmatprep.subr.mxu0 0.0
    %825 = vmatpush2.msra.mxu0 0.0
    %826 = vmatprep.subr.mxu0 0.0
    %827 = vmatpush2.msra.mxu0 0.0
    %828 = vmatprep.subr.mxu0 0.0
    %829 = vmatpush2.msra.mxu0 0.0
    %830 = vmatprep.subr.mxu0 0.0
    %831 = vmatpush2.msra.mxu0 0.0
    %832 = vmatprep.subr.mxu0 0.0
    %833 = vmatpush2.msra.mxu0 0.0
    %834 = vmatprep.mubr.f32.mxu0 0.0
    %835 = vmatmul.mubr.f32.gmra.mxu0 %v765
    %v836 = vpop.f32.mrf.mxu0
    %v837 = vadd.f32 0.0, %v836
    %v838 = vpop.f32.mrf.mxu0
    %839 = vdwg.mxu0
    %v840 = vld [vmem:[#allocation2] sm:$0xf]
    %v841 = vld [vmem:[#allocation2 + $0x8] sm:$0xf]
    %844 = vrot.lane.b32.xlu0 %v840, 16
    %v845 = vpop.permute.xlu0 %844
    %846 = vrot.lane.b32.xlu0 %v841, 16
    %v847 = vpop.permute.xlu0 %846
    %v850 = vsel %vm42, %v845, 0.0
    %851 = vadd.xlane.f32.xlu0 %v850
    %v852 = vpop.xlane.xlu0 %851
    %v853 = vsel %vm42, %v847, 0.0
    %854 = vadd.xlane.f32.xlu0 %v853
    %v855 = vpop.xlane.xlu0 %854
    %v856 = vmul.f32 %v852, %v49
    %v857 = vmul.f32 %v855, %v49
    %vm858 = vcmask 1044352
    %v859 = vsel %vm858, %v840, -inf
    %860 = vmax.xlane.f32.xlu0 %v859
    %v861 = vpop.xlane.xlu0 %860
    %v862 = vsel %vm858, %v841, -inf
    %863 = vmax.xlane.f32.xlu0 %v862
    %v864 = vpop.xlane.xlu0 %863
    %v865 = vadd.f32 %v856, %v861
    %v866 = vadd.f32 %v857, %v864
    %s867 = scalar_lea.vmem [#allocation5], 28
    %v868 = vld [vmem:[%s867] sm:$0xf]
    %v871 = vlaneseq
    %v872 = vshrl.u32 %v871, 7
    %v873 = vsub.s32 %v64, %v872
    %v874 = vrot.slane %v865, %v873
    %v875 = vlaneseq
    %v876 = vshrl.u32 %v875, 7
    %v877 = vsub.s32 %v64, %v876
    %v878 = vrot.slane %v866, %v877
    %v879 = vsel %vm73, %v878, %v874
    %v880 = vsel %vm75, %v879, 0
    %v883 = vsel %vm78, %v868, 0
    %885 = vmatprep.subr.mxu0 0.0
    %886 = vmatpush1.msra.mxu0 0.0
    %887 = vmatprep.subr.mxu0 0.0
    %888 = vmatpush1.msra.mxu0 0.0
    %889 = vmatprep.subr.mxu0 0.0
    %890 = vmatpush1.msra.mxu0 0.0
    %891 = vmatprep.subr.mxu0 0.0
    %892 = vmatpush1.msra.mxu0 0.0
    %893 = vmatprep.subr.mxu0 0.0
    %894 = vmatpush1.msra.mxu0 0.0
    %895 = vmatprep.subr.mxu0 0.0
    %896 = vmatpush1.msra.mxu0 0.0
    %897 = vmatprep.subr.mxu0 0.0
    %898 = vmatpush1.msra.mxu0 0.0
    %899 = vmatprep.subr.mxu0 0.0
    %900 = vmatpush1.msra.mxu0 0.0
    %901 = vmatprep.subr.mxu0 0.0
    %902 = vmatpush1.msra.mxu0 0.0
    %903 = vmatprep.subr.mxu0 0.0
    %904 = vmatpush1.msra.mxu0 0.0
    %905 = vmatprep.subr.mxu0 0.0
    %906 = vmatpush1.msra.mxu0 0.0
    %907 = vmatprep.subr.mxu0 0.0
    %908 = vmatpush1.msra.mxu0 0.0
    %909 = vmatprep.subr.mxu0 0.0
    %910 = vmatpush1.msra.mxu0 0.0
    %911 = vmatprep.subr.mxu0 0.0
    %912 = vmatpush1.msra.mxu0 0.0
    %913 = vmatprep.subr.mxu0 0.0
    %914 = vmatpush1.msra.mxu0 0.0
    %915 = vmatprep.subr.mxu0 0.0
    %916 = vmatpush1.msra.mxu0 %v883
    %917 = vmatprep.subr.mxu0 0.0
    %918 = vmatpush2.msra.mxu0 0.0
    %919 = vmatprep.subr.mxu0 0.0
    %920 = vmatpush2.msra.mxu0 0.0
    %921 = vmatprep.subr.mxu0 0.0
    %922 = vmatpush2.msra.mxu0 0.0
    %923 = vmatprep.subr.mxu0 0.0
    %924 = vmatpush2.msra.mxu0 0.0
    %925 = vmatprep.subr.mxu0 0.0
    %926 = vmatpush2.msra.mxu0 0.0
    %927 = vmatprep.subr.mxu0 0.0
    %928 = vmatpush2.msra.mxu0 0.0
    %929 = vmatprep.subr.mxu0 0.0
    %930 = vmatpush2.msra.mxu0 0.0
    %931 = vmatprep.subr.mxu0 0.0
    %932 = vmatpush2.msra.mxu0 0.0
    %933 = vmatprep.subr.mxu0 0.0
    %934 = vmatpush2.msra.mxu0 0.0
    %935 = vmatprep.subr.mxu0 0.0
    %936 = vmatpush2.msra.mxu0 0.0
    %937 = vmatprep.subr.mxu0 0.0
    %938 = vmatpush2.msra.mxu0 0.0
    %939 = vmatprep.subr.mxu0 0.0
    %940 = vmatpush2.msra.mxu0 0.0
    %941 = vmatprep.subr.mxu0 0.0
    %942 = vmatpush2.msra.mxu0 0.0
    %943 = vmatprep.subr.mxu0 0.0
    %944 = vmatpush2.msra.mxu0 0.0
    %945 = vmatprep.subr.mxu0 0.0
    %946 = vmatpush2.msra.mxu0 0.0
    %947 = vmatprep.subr.mxu0 0.0
    %948 = vmatpush2.msra.mxu0 0.0
    %949 = vmatprep.mubr.f32.mxu0 0.0
    %950 = vmatmul.mubr.f32.gmra.mxu0 %v880
    %v951 = vpop.f32.mrf.mxu0
    %v952 = vadd.f32 0.0, %v951
    %v953 = vpop.f32.mrf.mxu0
    %954 = vdwg.mxu0
    %v955 = vld [vmem:[#allocation2 + $0x4] sm:$0xf]
    %v956 = vld [vmem:[#allocation2 + $0xc] sm:$0xf]
    %v957 = vsel %vm42, %v955, 0.0
    %958 = vadd.xlane.f32.xlu0 %v957
    %v959 = vpop.xlane.xlu0 %958
    %v960 = vsel %vm42, %v956, 0.0
    %961 = vadd.xlane.f32.xlu0 %v960
    %v962 = vpop.xlane.xlu0 %961
    %v963 = vmul.f32 %v959, %v49
    %v964 = vmul.f32 %v962, %v49
    %v965 = vsel %vm42, %v955, -inf
    %966 = vmax.xlane.f32.xlu0 %v965
    %v967 = vpop.xlane.xlu0 %966
    %v968 = vsel %vm42, %v956, -inf
    %969 = vmax.xlane.f32.xlu0 %v968
    %v970 = vpop.xlane.xlu0 %969
    %v971 = vadd.f32 %v963, %v967
    %v972 = vadd.f32 %v964, %v970
    %s973 = scalar_lea.vmem [#allocation5], 32
    %v974 = vld [vmem:[%s973] sm:$0xf]
    %v977 = vlaneseq
    %v978 = vshrl.u32 %v977, 7
    %v979 = vsub.s32 %v64, %v978
    %v980 = vrot.slane %v971, %v979
    %v981 = vlaneseq
    %v982 = vshrl.u32 %v981, 7
    %v983 = vsub.s32 %v64, %v982
    %v984 = vrot.slane %v972, %v983
    %v985 = vsel %vm73, %v984, %v980
    %v986 = vsel %vm75, %v985, 0
    %v989 = vsel %vm78, %v974, 0
    %991 = vmatprep.subr.mxu0 0.0
    %992 = vmatpush1.msra.mxu0 0.0
    %993 = vmatprep.subr.mxu0 0.0
    %994 = vmatpush1.msra.mxu0 0.0
    %995 = vmatprep.subr.mxu0 0.0
    %996 = vmatpush1.msra.mxu0 0.0
    %997 = vmatprep.subr.mxu0 0.0
    %998 = vmatpush1.msra.mxu0 0.0
    %999 = vmatprep.subr.mxu0 0.0
    %1000 = vmatpush1.msra.mxu0 0.0
    %1001 = vmatprep.subr.mxu0 0.0
    %1002 = vmatpush1.msra.mxu0 0.0
    %1003 = vmatprep.subr.mxu0 0.0
    %1004 = vmatpush1.msra.mxu0 0.0
    %1005 = vmatprep.subr.mxu0 0.0
    %1006 = vmatpush1.msra.mxu0 0.0
    %1007 = vmatprep.subr.mxu0 0.0
    %1008 = vmatpush1.msra.mxu0 0.0
    %1009 = vmatprep.subr.mxu0 0.0
    %1010 = vmatpush1.msra.mxu0 0.0
    %1011 = vmatprep.subr.mxu0 0.0
    %1012 = vmatpush1.msra.mxu0 0.0
    %1013 = vmatprep.subr.mxu0 0.0
    %1014 = vmatpush1.msra.mxu0 0.0
    %1015 = vmatprep.subr.mxu0 0.0
    %1016 = vmatpush1.msra.mxu0 0.0
    %1017 = vmatprep.subr.mxu0 0.0
    %1018 = vmatpush1.msra.mxu0 0.0
    %1019 = vmatprep.subr.mxu0 0.0
    %1020 = vmatpush1.msra.mxu0 0.0
    %1021 = vmatprep.subr.mxu0 0.0
    %1022 = vmatpush1.msra.mxu0 %v989
    %1023 = vmatprep.subr.mxu0 0.0
    %1024 = vmatpush2.msra.mxu0 0.0
    %1025 = vmatprep.subr.mxu0 0.0
    %1026 = vmatpush2.msra.mxu0 0.0
    %1027 = vmatprep.subr.mxu0 0.0
    %1028 = vmatpush2.msra.mxu0 0.0
    %1029 = vmatprep.subr.mxu0 0.0
    %1030 = vmatpush2.msra.mxu0 0.0
    %1031 = vmatprep.subr.mxu0 0.0
    %1032 = vmatpush2.msra.mxu0 0.0
    %1033 = vmatprep.subr.mxu0 0.0
    %1034 = vmatpush2.msra.mxu0 0.0
    %1035 = vmatprep.subr.mxu0 0.0
    %1036 = vmatpush2.msra.mxu0 0.0
    %1037 = vmatprep.subr.mxu0 0.0
    %1038 = vmatpush2.msra.mxu0 0.0
    %1039 = vmatprep.subr.mxu0 0.0
    %1040 = vmatpush2.msra.mxu0 0.0
    %1041 = vmatprep.subr.mxu0 0.0
    %1042 = vmatpush2.msra.mxu0 0.0
    %1043 = vmatprep.subr.mxu0 0.0
    %1044 = vmatpush2.msra.mxu0 0.0
    %1045 = vmatprep.subr.mxu0 0.0
    %1046 = vmatpush2.msra.mxu0 0.0
    %1047 = vmatprep.subr.mxu0 0.0
    %1048 = vmatpush2.msra.mxu0 0.0
    %1049 = vmatprep.subr.mxu0 0.0
    %1050 = vmatpush2.msra.mxu0 0.0
    %1051 = vmatprep.subr.mxu0 0.0
    %1052 = vmatpush2.msra.mxu0 0.0
    %1053 = vmatprep.subr.mxu0 0.0
    %1054 = vmatpush2.msra.mxu0 0.0
    %1055 = vmatprep.mubr.f32.mxu0 0.0
    %1056 = vmatmul.mubr.f32.gmra.mxu0 %v986
    %v1057 = vpop.f32.mrf.mxu0
    %v1058 = vadd.f32 0.0, %v1057
    %v1059 = vpop.f32.mrf.mxu0
    %1060 = vdwg.mxu0
    %1063 = vrot.lane.b32.xlu0 %v955, 112
    %v1064 = vpop.permute.xlu0 %1063
    %1065 = vrot.lane.b32.xlu0 %v956, 112
    %v1066 = vpop.permute.xlu0 %1065
    %v1069 = vsel %vm42, %v1064, 0.0
    %1070 = vadd.xlane.f32.xlu0 %v1069
    %v1071 = vpop.xlane.xlu0 %1070
    %v1072 = vsel %vm42, %v1066, 0.0
    %1073 = vadd.xlane.f32.xlu0 %v1072
    %v1074 = vpop.xlane.xlu0 %1073
    %v1075 = vmul.f32 %v1071, %v49
    %v1076 = vmul.f32 %v1074, %v49
    %v1077 = vsel %vm168, %v955, -inf
    %1078 = vmax.xlane.f32.xlu0 %v1077
    %v1079 = vpop.xlane.xlu0 %1078
    %v1080 = vsel %vm168, %v956, -inf
    %1081 = vmax.xlane.f32.xlu0 %v1080
    %v1082 = vpop.xlane.xlu0 %1081
    %v1083 = vadd.f32 %v1075, %v1079
    %v1084 = vadd.f32 %v1076, %v1082
    %s1085 = scalar_lea.vmem [#allocation5], 36
    %v1086 = vld [vmem:[%s1085] sm:$0xf]
    %v1089 = vlaneseq
    %v1090 = vshrl.u32 %v1089, 7
    %v1091 = vsub.s32 %v64, %v1090
    %v1092 = vrot.slane %v1083, %v1091
    %v1093 = vlaneseq
    %v1094 = vshrl.u32 %v1093, 7
    %v1095 = vsub.s32 %v64, %v1094
    %v1096 = vrot.slane %v1084, %v1095
    %v1097 = vsel %vm73, %v1096, %v1092
    %v1098 = vsel %vm75, %v1097, 0
    %v1101 = vsel %vm78, %v1086, 0
    %1103 = vmatprep.subr.mxu0 0.0
    %1104 = vmatpush1.msra.mxu0 0.0
    %1105 = vmatprep.subr.mxu0 0.0
    %1106 = vmatpush1.msra.mxu0 0.0
    %1107 = vmatprep.subr.mxu0 0.0
    %1108 = vmatpush1.msra.mxu0 0.0
    %1109 = vmatprep.subr.mxu0 0.0
    %1110 = vmatpush1.msra.mxu0 0.0
    %1111 = vmatprep.subr.mxu0 0.0
    %1112 = vmatpush1.msra.mxu0 0.0
    %1113 = vmatprep.subr.mxu0 0.0
    %1114 = vmatpush1.msra.mxu0 0.0
    %1115 = vmatprep.subr.mxu0 0.0
    %1116 = vmatpush1.msra.mxu0 0.0
    %1117 = vmatprep.subr.mxu0 0.0
    %1118 = vmatpush1.msra.mxu0 0.0
    %1119 = vmatprep.subr.mxu0 0.0
    %1120 = vmatpush1.msra.mxu0 0.0
    %1121 = vmatprep.subr.mxu0 0.0
    %1122 = vmatpush1.msra.mxu0 0.0
    %1123 = vmatprep.subr.mxu0 0.0
    %1124 = vmatpush1.msra.mxu0 0.0
    %1125 = vmatprep.subr.mxu0 0.0
    %1126 = vmatpush1.msra.mxu0 0.0
    %1127 = vmatprep.subr.mxu0 0.0
    %1128 = vmatpush1.msra.mxu0 0.0
    %1129 = vmatprep.subr.mxu0 0.0
    %1130 = vmatpush1.msra.mxu0 0.0
    %1131 = vmatprep.subr.mxu0 0.0
    %1132 = vmatpush1.msra.mxu0 0.0
    %1133 = vmatprep.subr.mxu0 0.0
    %1134 = vmatpush1.msra.mxu0 %v1101
    %1135 = vmatprep.subr.mxu0 0.0
    %1136 = vmatpush2.msra.mxu0 0.0
    %1137 = vmatprep.subr.mxu0 0.0
    %1138 = vmatpush2.msra.mxu0 0.0
    %1139 = vmatprep.subr.mxu0 0.0
    %1140 = vmatpush2.msra.mxu0 0.0
    %1141 = vmatprep.subr.mxu0 0.0
    %1142 = vmatpush2.msra.mxu0 0.0
    %1143 = vmatprep.subr.mxu0 0.0
    %1144 = vmatpush2.msra.mxu0 0.0
    %1145 = vmatprep.subr.mxu0 0.0
    %1146 = vmatpush2.msra.mxu0 0.0
    %1147 = vmatprep.subr.mxu0 0.0
    %1148 = vmatpush2.msra.mxu0 0.0
    %1149 = vmatprep.subr.mxu0 0.0
    %1150 = vmatpush2.msra.mxu0 0.0
    %1151 = vmatprep.subr.mxu0 0.0
    %1152 = vmatpush2.msra.mxu0 0.0
    %1153 = vmatprep.subr.mxu0 0.0
    %1154 = vmatpush2.msra.mxu0 0.0
    %1155 = vmatprep.subr.mxu0 0.0
    %1156 = vmatpush2.msra.mxu0 0.0
    %1157 = vmatprep.subr.mxu0 0.0
    %1158 = vmatpush2.msra.mxu0 0.0
    %1159 = vmatprep.subr.mxu0 0.0
    %1160 = vmatpush2.msra.mxu0 0.0
    %1161 = vmatprep.subr.mxu0 0.0
    %1162 = vmatpush2.msra.mxu0 0.0
    %1163 = vmatprep.subr.mxu0 0.0
    %1164 = vmatpush2.msra.mxu0 0.0
    %1165 = vmatprep.subr.mxu0 0.0
    %1166 = vmatpush2.msra.mxu0 0.0
    %1167 = vmatprep.mubr.f32.mxu0 0.0
    %1168 = vmatmul.mubr.f32.gmra.mxu0 %v1098
    %v1169 = vpop.f32.mrf.mxu0
    %v1170 = vadd.f32 0.0, %v1169
    %v1171 = vpop.f32.mrf.mxu0
    %1172 = vdwg.mxu0
    %v1173 = vld [vmem:[#allocation2 + $0x4] sm:$0xf]
    %v1174 = vld [vmem:[#allocation2 + $0xc] sm:$0xf]
    %1177 = vrot.lane.b32.xlu0 %v1173, 96
    %v1178 = vpop.permute.xlu0 %1177
    %1179 = vrot.lane.b32.xlu0 %v1174, 96
    %v1180 = vpop.permute.xlu0 %1179
    %v1183 = vsel %vm42, %v1178, 0.0
    %1184 = vadd.xlane.f32.xlu0 %v1183
    %v1185 = vpop.xlane.xlu0 %1184
    %v1186 = vsel %vm42, %v1180, 0.0
    %1187 = vadd.xlane.f32.xlu0 %v1186
    %v1188 = vpop.xlane.xlu0 %1187
    %v1189 = vmul.f32 %v1185, %v49
    %v1190 = vmul.f32 %v1188, %v49
    %v1191 = vsel %vm283, %v1173, -inf
    %1192 = vmax.xlane.f32.xlu0 %v1191
    %v1193 = vpop.xlane.xlu0 %1192
    %v1194 = vsel %vm283, %v1174, -inf
    %1195 = vmax.xlane.f32.xlu0 %v1194
    %v1196 = vpop.xlane.xlu0 %1195
    %v1197 = vadd.f32 %v1189, %v1193
    %v1198 = vadd.f32 %v1190, %v1196
    %s1199 = scalar_lea.vmem [#allocation5], 40
    %v1200 = vld [vmem:[%s1199] sm:$0xf]
    %v1203 = vlaneseq
    %v1204 = vshrl.u32 %v1203, 7
    %v1205 = vsub.s32 %v64, %v1204
    %v1206 = vrot.slane %v1197, %v1205
    %v1207 = vlaneseq
    %v1208 = vshrl.u32 %v1207, 7
    %v1209 = vsub.s32 %v64, %v1208
    %v1210 = vrot.slane %v1198, %v1209
    %v1211 = vsel %vm73, %v1210, %v1206
    %v1212 = vsel %vm75, %v1211, 0
    %v1215 = vsel %vm78, %v1200, 0
    %1217 = vmatprep.subr.mxu0 0.0
    %1218 = vmatpush1.msra.mxu0 0.0
    %1219 = vmatprep.subr.mxu0 0.0
    %1220 = vmatpush1.msra.mxu0 0.0
    %1221 = vmatprep.subr.mxu0 0.0
    %1222 = vmatpush1.msra.mxu0 0.0
    %1223 = vmatprep.subr.mxu0 0.0
    %1224 = vmatpush1.msra.mxu0 0.0
    %1225 = vmatprep.subr.mxu0 0.0
    %1226 = vmatpush1.msra.mxu0 0.0
    %1227 = vmatprep.subr.mxu0 0.0
    %1228 = vmatpush1.msra.mxu0 0.0
    %1229 = vmatprep.subr.mxu0 0.0
    %1230 = vmatpush1.msra.mxu0 0.0
    %1231 = vmatprep.subr.mxu0 0.0
    %1232 = vmatpush1.msra.mxu0 0.0
    %1233 = vmatprep.subr.mxu0 0.0
    %1234 = vmatpush1.msra.mxu0 0.0
    %1235 = vmatprep.subr.mxu0 0.0
    %1236 = vmatpush1.msra.mxu0 0.0
    %1237 = vmatprep.subr.mxu0 0.0
    %1238 = vmatpush1.msra.mxu0 0.0
    %1239 = vmatprep.subr.mxu0 0.0
    %1240 = vmatpush1.msra.mxu0 0.0
    %1241 = vmatprep.subr.mxu0 0.0
    %1242 = vmatpush1.msra.mxu0 0.0
    %1243 = vmatprep.subr.mxu0 0.0
    %1244 = vmatpush1.msra.mxu0 0.0
    %1245 = vmatprep.subr.mxu0 0.0
    %1246 = vmatpush1.msra.mxu0 0.0
    %1247 = vmatprep.subr.mxu0 0.0
    %1248 = vmatpush1.msra.mxu0 %v1215
    %1249 = vmatprep.subr.mxu0 0.0
    %1250 = vmatpush2.msra.mxu0 0.0
    %1251 = vmatprep.subr.mxu0 0.0
    %1252 = vmatpush2.msra.mxu0 0.0
    %1253 = vmatprep.subr.mxu0 0.0
    %1254 = vmatpush2.msra.mxu0 0.0
    %1255 = vmatprep.subr.mxu0 0.0
    %1256 = vmatpush2.msra.mxu0 0.0
    %1257 = vmatprep.subr.mxu0 0.0
    %1258 = vmatpush2.msra.mxu0 0.0
    %1259 = vmatprep.subr.mxu0 0.0
    %1260 = vmatpush2.msra.mxu0 0.0
    %1261 = vmatprep.subr.mxu0 0.0
    %1262 = vmatpush2.msra.mxu0 0.0
    %1263 = vmatprep.subr.mxu0 0.0
    %1264 = vmatpush2.msra.mxu0 0.0
    %1265 = vmatprep.subr.mxu0 0.0
    %1266 = vmatpush2.msra.mxu0 0.0
    %1267 = vmatprep.subr.mxu0 0.0
    %1268 = vmatpush2.msra.mxu0 0.0
    %1269 = vmatprep.subr.mxu0 0.0
    %1270 = vmatpush2.msra.mxu0 0.0
    %1271 = vmatprep.subr.mxu0 0.0
    %1272 = vmatpush2.msra.mxu0 0.0
    %1273 = vmatprep.subr.mxu0 0.0
    %1274 = vmatpush2.msra.mxu0 0.0
    %1275 = vmatprep.subr.mxu0 0.0
    %1276 = vmatpush2.msra.mxu0 0.0
    %1277 = vmatprep.subr.mxu0 0.0
    %1278 = vmatpush2.msra.mxu0 0.0
    %1279 = vmatprep.subr.mxu0 0.0
    %1280 = vmatpush2.msra.mxu0 0.0
    %1281 = vmatprep.mubr.f32.mxu0 0.0
    %1282 = vmatmul.mubr.f32.gmra.mxu0 %v1212
    %v1283 = vpop.f32.mrf.mxu0
    %v1284 = vadd.f32 0.0, %v1283
    %v1285 = vpop.f32.mrf.mxu0
    %1286 = vdwg.mxu0
    %v1287 = vld [vmem:[#allocation2 + $0x4] sm:$0xf]
    %v1288 = vld [vmem:[#allocation2 + $0xc] sm:$0xf]
    %1291 = vrot.lane.b32.xlu0 %v1287, 80
    %v1292 = vpop.permute.xlu0 %1291
    %1293 = vrot.lane.b32.xlu0 %v1288, 80
    %v1294 = vpop.permute.xlu0 %1293
    %v1297 = vsel %vm42, %v1292, 0.0
    %1298 = vadd.xlane.f32.xlu0 %v1297
    %v1299 = vpop.xlane.xlu0 %1298
    %v1300 = vsel %vm42, %v1294, 0.0
    %1301 = vadd.xlane.f32.xlu0 %v1300
    %v1302 = vpop.xlane.xlu0 %1301
    %v1303 = vmul.f32 %v1299, %v49
    %v1304 = vmul.f32 %v1302, %v49
    %v1305 = vsel %vm398, %v1287, -inf
    %1306 = vmax.xlane.f32.xlu0 %v1305
    %v1307 = vpop.xlane.xlu0 %1306
    %v1308 = vsel %vm398, %v1288, -inf
    %1309 = vmax.xlane.f32.xlu0 %v1308
    %v1310 = vpop.xlane.xlu0 %1309
    %v1311 = vadd.f32 %v1303, %v1307
    %v1312 = vadd.f32 %v1304, %v1310
    %s1313 = scalar_lea.vmem [#allocation5], 44
    %v1314 = vld [vmem:[%s1313] sm:$0xf]
    %v1317 = vlaneseq
    %v1318 = vshrl.u32 %v1317, 7
    %v1319 = vsub.s32 %v64, %v1318
    %v1320 = vrot.slane %v1311, %v1319
    %v1321 = vlaneseq
    %v1322 = vshrl.u32 %v1321, 7
    %v1323 = vsub.s32 %v64, %v1322
    %v1324 = vrot.slane %v1312, %v1323
    %v1325 = vsel %vm73, %v1324, %v1320
    %v1326 = vsel %vm75, %v1325, 0
    %v1329 = vsel %vm78, %v1314, 0
    %1331 = vmatprep.subr.mxu0 0.0
    %1332 = vmatpush1.msra.mxu0 0.0
    %1333 = vmatprep.subr.mxu0 0.0
    %1334 = vmatpush1.msra.mxu0 0.0
    %1335 = vmatprep.subr.mxu0 0.0
    %1336 = vmatpush1.msra.mxu0 0.0
    %1337 = vmatprep.subr.mxu0 0.0
    %1338 = vmatpush1.msra.mxu0 0.0
    %1339 = vmatprep.subr.mxu0 0.0
    %1340 = vmatpush1.msra.mxu0 0.0
    %1341 = vmatprep.subr.mxu0 0.0
    %1342 = vmatpush1.msra.mxu0 0.0
    %1343 = vmatprep.subr.mxu0 0.0
    %1344 = vmatpush1.msra.mxu0 0.0
    %1345 = vmatprep.subr.mxu0 0.0
    %1346 = vmatpush1.msra.mxu0 0.0
    %1347 = vmatprep.subr.mxu0 0.0
    %1348 = vmatpush1.msra.mxu0 0.0
    %1349 = vmatprep.subr.mxu0 0.0
    %1350 = vmatpush1.msra.mxu0 0.0
    %1351 = vmatprep.subr.mxu0 0.0
    %1352 = vmatpush1.msra.mxu0 0.0
    %1353 = vmatprep.subr.mxu0 0.0
    %1354 = vmatpush1.msra.mxu0 0.0
    %1355 = vmatprep.subr.mxu0 0.0
    %1356 = vmatpush1.msra.mxu0 0.0
    %1357 = vmatprep.subr.mxu0 0.0
    %1358 = vmatpush1.msra.mxu0 0.0
    %1359 = vmatprep.subr.mxu0 0.0
    %1360 = vmatpush1.msra.mxu0 0.0
    %1361 = vmatprep.subr.mxu0 0.0
    %1362 = vmatpush1.msra.mxu0 %v1329
    %1363 = vmatprep.subr.mxu0 0.0
    %1364 = vmatpush2.msra.mxu0 0.0
    %1365 = vmatprep.subr.mxu0 0.0
    %1366 = vmatpush2.msra.mxu0 0.0
    %1367 = vmatprep.subr.mxu0 0.0
    %1368 = vmatpush2.msra.mxu0 0.0
    %1369 = vmatprep.subr.mxu0 0.0
    %1370 = vmatpush2.msra.mxu0 0.0
    %1371 = vmatprep.subr.mxu0 0.0
    %1372 = vmatpush2.msra.mxu0 0.0
    %1373 = vmatprep.subr.mxu0 0.0
    %1374 = vmatpush2.msra.mxu0 0.0
    %1375 = vmatprep.subr.mxu0 0.0
    %1376 = vmatpush2.msra.mxu0 0.0
    %1377 = vmatprep.subr.mxu0 0.0
    %1378 = vmatpush2.msra.mxu0 0.0
    %1379 = vmatprep.subr.mxu0 0.0
    %1380 = vmatpush2.msra.mxu0 0.0
    %1381 = vmatprep.subr.mxu0 0.0
    %1382 = vmatpush2.msra.mxu0 0.0
    %1383 = vmatprep.subr.mxu0 0.0
    %1384 = vmatpush2.msra.mxu0 0.0
    %1385 = vmatprep.subr.mxu0 0.0
    %1386 = vmatpush2.msra.mxu0 0.0
    %1387 = vmatprep.subr.mxu0 0.0
    %1388 = vmatpush2.msra.mxu0 0.0
    %1389 = vmatprep.subr.mxu0 0.0
    %1390 = vmatpush2.msra.mxu0 0.0
    %1391 = vmatprep.subr.mxu0 0.0
    %1392 = vmatpush2.msra.mxu0 0.0
    %1393 = vmatprep.subr.mxu0 0.0
    %1394 = vmatpush2.msra.mxu0 0.0
    %1395 = vmatprep.mubr.f32.mxu0 0.0
    %1396 = vmatmul.mubr.f32.gmra.mxu0 %v1326
    %v1397 = vpop.f32.mrf.mxu0
    %v1398 = vadd.f32 0.0, %v1397
    %v1399 = vpop.f32.mrf.mxu0
    %1400 = vdwg.mxu0
    %v1401 = vld [vmem:[#allocation2 + $0x4] sm:$0xf]
    %v1402 = vld [vmem:[#allocation2 + $0xc] sm:$0xf]
    %1405 = vrot.lane.b32.xlu0 %v1401, 64
    %v1406 = vpop.permute.xlu0 %1405
    %1407 = vrot.lane.b32.xlu0 %v1402, 64
    %v1408 = vpop.permute.xlu0 %1407
    %v1411 = vsel %vm42, %v1406, 0.0
    %1412 = vadd.xlane.f32.xlu0 %v1411
    %v1413 = vpop.xlane.xlu0 %1412
    %v1414 = vsel %vm42, %v1408, 0.0
    %1415 = vadd.xlane.f32.xlu0 %v1414
    %v1416 = vpop.xlane.xlu0 %1415
    %v1417 = vmul.f32 %v1413, %v49
    %v1418 = vmul.f32 %v1416, %v49
    %v1419 = vsel %vm513, %v1401, -inf
    %1420 = vmax.xlane.f32.xlu0 %v1419
    %v1421 = vpop.xlane.xlu0 %1420
    %v1422 = vsel %vm513, %v1402, -inf
    %1423 = vmax.xlane.f32.xlu0 %v1422
    %v1424 = vpop.xlane.xlu0 %1423
    %v1425 = vadd.f32 %v1417, %v1421
    %v1426 = vadd.f32 %v1418, %v1424
    %s1427 = scalar_lea.vmem [#allocation5], 48
    %v1428 = vld [vmem:[%s1427] sm:$0xf]
    %v1431 = vlaneseq
    %v1432 = vshrl.u32 %v1431, 7
    %v1433 = vsub.s32 %v64, %v1432
    %v1434 = vrot.slane %v1425, %v1433
    %v1435 = vlaneseq
    %v1436 = vshrl.u32 %v1435, 7
    %v1437 = vsub.s32 %v64, %v1436
    %v1438 = vrot.slane %v1426, %v1437
    %v1439 = vsel %vm73, %v1438, %v1434
    %v1440 = vsel %vm75, %v1439, 0
    %v1443 = vsel %vm78, %v1428, 0
    %1445 = vmatprep.subr.mxu0 0.0
    %1446 = vmatpush1.msra.mxu0 0.0
    %1447 = vmatprep.subr.mxu0 0.0
    %1448 = vmatpush1.msra.mxu0 0.0
    %1449 = vmatprep.subr.mxu0 0.0
    %1450 = vmatpush1.msra.mxu0 0.0
    %1451 = vmatprep.subr.mxu0 0.0
    %1452 = vmatpush1.msra.mxu0 0.0
    %1453 = vmatprep.subr.mxu0 0.0
    %1454 = vmatpush1.msra.mxu0 0.0
    %1455 = vmatprep.subr.mxu0 0.0
    %1456 = vmatpush1.msra.mxu0 0.0
    %1457 = vmatprep.subr.mxu0 0.0
    %1458 = vmatpush1.msra.mxu0 0.0
    %1459 = vmatprep.subr.mxu0 0.0
    %1460 = vmatpush1.msra.mxu0 0.0
    %1461 = vmatprep.subr.mxu0 0.0
    %1462 = vmatpush1.msra.mxu0 0.0
    %1463 = vmatprep.subr.mxu0 0.0
    %1464 = vmatpush1.msra.mxu0 0.0
    %1465 = vmatprep.subr.mxu0 0.0
    %1466 = vmatpush1.msra.mxu0 0.0
    %1467 = vmatprep.subr.mxu0 0.0
    %1468 = vmatpush1.msra.mxu0 0.0
    %1469 = vmatprep.subr.mxu0 0.0
    %1470 = vmatpush1.msra.mxu0 0.0
    %1471 = vmatprep.subr.mxu0 0.0
    %1472 = vmatpush1.msra.mxu0 0.0
    %1473 = vmatprep.subr.mxu0 0.0
    %1474 = vmatpush1.msra.mxu0 0.0
    %1475 = vmatprep.subr.mxu0 0.0
    %1476 = vmatpush1.msra.mxu0 %v1443
    %1477 = vmatprep.subr.mxu0 0.0
    %1478 = vmatpush2.msra.mxu0 0.0
    %1479 = vmatprep.subr.mxu0 0.0
    %1480 = vmatpush2.msra.mxu0 0.0
    %1481 = vmatprep.subr.mxu0 0.0
    %1482 = vmatpush2.msra.mxu0 0.0
    %1483 = vmatprep.subr.mxu0 0.0
    %1484 = vmatpush2.msra.mxu0 0.0
    %1485 = vmatprep.subr.mxu0 0.0
    %1486 = vmatpush2.msra.mxu0 0.0
    %1487 = vmatprep.subr.mxu0 0.0
    %1488 = vmatpush2.msra.mxu0 0.0
    %1489 = vmatprep.subr.mxu0 0.0
    %1490 = vmatpush2.msra.mxu0 0.0
    %1491 = vmatprep.subr.mxu0 0.0
    %1492 = vmatpush2.msra.mxu0 0.0
    %1493 = vmatprep.subr.mxu0 0.0
    %1494 = vmatpush2.msra.mxu0 0.0
    %1495 = vmatprep.subr.mxu0 0.0
    %1496 = vmatpush2.msra.mxu0 0.0
    %1497 = vmatprep.subr.mxu0 0.0
    %1498 = vmatpush2.msra.mxu0 0.0
    %1499 = vmatprep.subr.mxu0 0.0
    %1500 = vmatpush2.msra.mxu0 0.0
    %1501 = vmatprep.subr.mxu0 0.0
    %1502 = vmatpush2.msra.mxu0 0.0
    %1503 = vmatprep.subr.mxu0 0.0
    %1504 = vmatpush2.msra.mxu0 0.0
    %1505 = vmatprep.subr.mxu0 0.0
    %1506 = vmatpush2.msra.mxu0 0.0
    %1507 = vmatprep.subr.mxu0 0.0
    %1508 = vmatpush2.msra.mxu0 0.0
    %1509 = vmatprep.mubr.f32.mxu0 0.0
    %1510 = vmatmul.mubr.f32.gmra.mxu0 %v1440
    %v1511 = vpop.f32.mrf.mxu0
    %v1512 = vadd.f32 0.0, %v1511
    %v1513 = vpop.f32.mrf.mxu0
    %1514 = vdwg.mxu0
    %v1515 = vld [vmem:[#allocation2 + $0x4] sm:$0xf]
    %v1516 = vld [vmem:[#allocation2 + $0xc] sm:$0xf]
    %1519 = vrot.lane.b32.xlu0 %v1515, 48
    %v1520 = vpop.permute.xlu0 %1519
    %1521 = vrot.lane.b32.xlu0 %v1516, 48
    %v1522 = vpop.permute.xlu0 %1521
    %v1525 = vsel %vm42, %v1520, 0.0
    %1526 = vadd.xlane.f32.xlu0 %v1525
    %v1527 = vpop.xlane.xlu0 %1526
    %v1528 = vsel %vm42, %v1522, 0.0
    %1529 = vadd.xlane.f32.xlu0 %v1528
    %v1530 = vpop.xlane.xlu0 %1529
    %v1531 = vmul.f32 %v1527, %v49
    %v1532 = vmul.f32 %v1530, %v49
    %v1533 = vsel %vm628, %v1515, -inf
    %1534 = vmax.xlane.f32.xlu0 %v1533
    %v1535 = vpop.xlane.xlu0 %1534
    %v1536 = vsel %vm628, %v1516, -inf
    %1537 = vmax.xlane.f32.xlu0 %v1536
    %v1538 = vpop.xlane.xlu0 %1537
    %v1539 = vadd.f32 %v1531, %v1535
    %v1540 = vadd.f32 %v1532, %v1538
    %s1541 = scalar_lea.vmem [#allocation5], 52
    %v1542 = vld [vmem:[%s1541] sm:$0xf]
    %v1545 = vlaneseq
    %v1546 = vshrl.u32 %v1545, 7
    %v1547 = vsub.s32 %v64, %v1546
    %v1548 = vrot.slane %v1539, %v1547
    %v1549 = vlaneseq
    %v1550 = vshrl.u32 %v1549, 7
    %v1551 = vsub.s32 %v64, %v1550
    %v1552 = vrot.slane %v1540, %v1551
    %v1553 = vsel %vm73, %v1552, %v1548
    %v1554 = vsel %vm75, %v1553, 0
    %v1557 = vsel %vm78, %v1542, 0
    %1559 = vmatprep.subr.mxu0 0.0
    %1560 = vmatpush1.msra.mxu0 0.0
    %1561 = vmatprep.subr.mxu0 0.0
    %1562 = vmatpush1.msra.mxu0 0.0
    %1563 = vmatprep.subr.mxu0 0.0
    %1564 = vmatpush1.msra.mxu0 0.0
    %1565 = vmatprep.subr.mxu0 0.0
    %1566 = vmatpush1.msra.mxu0 0.0
    %1567 = vmatprep.subr.mxu0 0.0
    %1568 = vmatpush1.msra.mxu0 0.0
    %1569 = vmatprep.subr.mxu0 0.0
    %1570 = vmatpush1.msra.mxu0 0.0
    %1571 = vmatprep.subr.mxu0 0.0
    %1572 = vmatpush1.msra.mxu0 0.0
    %1573 = vmatprep.subr.mxu0 0.0
    %1574 = vmatpush1.msra.mxu0 0.0
    %1575 = vmatprep.subr.mxu0 0.0
    %1576 = vmatpush1.msra.mxu0 0.0
    %1577 = vmatprep.subr.mxu0 0.0
    %1578 = vmatpush1.msra.mxu0 0.0
    %1579 = vmatprep.subr.mxu0 0.0
    %1580 = vmatpush1.msra.mxu0 0.0
    %1581 = vmatprep.subr.mxu0 0.0
    %1582 = vmatpush1.msra.mxu0 0.0
    %1583 = vmatprep.subr.mxu0 0.0
    %1584 = vmatpush1.msra.mxu0 0.0
    %1585 = vmatprep.subr.mxu0 0.0
    %1586 = vmatpush1.msra.mxu0 0.0
    %1587 = vmatprep.subr.mxu0 0.0
    %1588 = vmatpush1.msra.mxu0 0.0
    %1589 = vmatprep.subr.mxu0 0.0
    %1590 = vmatpush1.msra.mxu0 %v1557
    %1591 = vmatprep.subr.mxu0 0.0
    %1592 = vmatpush2.msra.mxu0 0.0
    %1593 = vmatprep.subr.mxu0 0.0
    %1594 = vmatpush2.msra.mxu0 0.0
    %1595 = vmatprep.subr.mxu0 0.0
    %1596 = vmatpush2.msra.mxu0 0.0
    %1597 = vmatprep.subr.mxu0 0.0
    %1598 = vmatpush2.msra.mxu0 0.0
    %1599 = vmatprep.subr.mxu0 0.0
    %1600 = vmatpush2.msra.mxu0 0.0
    %1601 = vmatprep.subr.mxu0 0.0
    %1602 = vmatpush2.msra.mxu0 0.0
    %1603 = vmatprep.subr.mxu0 0.0
    %1604 = vmatpush2.msra.mxu0 0.0
    %1605 = vmatprep.subr.mxu0 0.0
    %1606 = vmatpush2.msra.mxu0 0.0
    %1607 = vmatprep.subr.mxu0 0.0
    %1608 = vmatpush2.msra.mxu0 0.0
    %1609 = vmatprep.subr.mxu0 0.0
    %1610 = vmatpush2.msra.mxu0 0.0
    %1611 = vmatprep.subr.mxu0 0.0
    %1612 = vmatpush2.msra.mxu0 0.0
    %1613 = vmatprep.subr.mxu0 0.0
    %1614 = vmatpush2.msra.mxu0 0.0
    %1615 = vmatprep.subr.mxu0 0.0
    %1616 = vmatpush2.msra.mxu0 0.0
    %1617 = vmatprep.subr.mxu0 0.0
    %1618 = vmatpush2.msra.mxu0 0.0
    %1619 = vmatprep.subr.mxu0 0.0
    %1620 = vmatpush2.msra.mxu0 0.0
    %1621 = vmatprep.subr.mxu0 0.0
    %1622 = vmatpush2.msra.mxu0 0.0
    %1623 = vmatprep.mubr.f32.mxu0 0.0
    %1624 = vmatmul.mubr.f32.gmra.mxu0 %v1554
    %v1625 = vpop.f32.mrf.mxu0
    %v1626 = vadd.f32 0.0, %v1625
    %v1627 = vpop.f32.mrf.mxu0
    %1628 = vdwg.mxu0
    %v1629 = vld [vmem:[#allocation2 + $0x4] sm:$0xf]
    %v1630 = vld [vmem:[#allocation2 + $0xc] sm:$0xf]
    %1633 = vrot.lane.b32.xlu0 %v1629, 32
    %v1634 = vpop.permute.xlu0 %1633
    %1635 = vrot.lane.b32.xlu0 %v1630, 32
    %v1636 = vpop.permute.xlu0 %1635
    %v1639 = vsel %vm42, %v1634, 0.0
    %1640 = vadd.xlane.f32.xlu0 %v1639
    %v1641 = vpop.xlane.xlu0 %1640
    %v1642 = vsel %vm42, %v1636, 0.0
    %1643 = vadd.xlane.f32.xlu0 %v1642
    %v1644 = vpop.xlane.xlu0 %1643
    %v1645 = vmul.f32 %v1641, %v49
    %v1646 = vmul.f32 %v1644, %v49
    %v1647 = vsel %vm743, %v1629, -inf
    %1648 = vmax.xlane.f32.xlu0 %v1647
    %v1649 = vpop.xlane.xlu0 %1648
    %v1650 = vsel %vm743, %v1630, -inf
    %1651 = vmax.xlane.f32.xlu0 %v1650
    %v1652 = vpop.xlane.xlu0 %1651
    %v1653 = vadd.f32 %v1645, %v1649
    %v1654 = vadd.f32 %v1646, %v1652
    %s1655 = scalar_lea.vmem [#allocation5], 56
    %v1656 = vld [vmem:[%s1655] sm:$0xf]
    %v1659 = vlaneseq
    %v1660 = vshrl.u32 %v1659, 7
    %v1661 = vsub.s32 %v64, %v1660
    %v1662 = vrot.slane %v1653, %v1661
    %v1663 = vlaneseq
    %v1664 = vshrl.u32 %v1663, 7
    %v1665 = vsub.s32 %v64, %v1664
    %v1666 = vrot.slane %v1654, %v1665
    %v1667 = vsel %vm73, %v1666, %v1662
    %v1668 = vsel %vm75, %v1667, 0
    %v1671 = vsel %vm78, %v1656, 0
    %1673 = vmatprep.subr.mxu0 0.0
    %1674 = vmatpush1.msra.mxu0 0.0
    %1675 = vmatprep.subr.mxu0 0.0
    %1676 = vmatpush1.msra.mxu0 0.0
    %1677 = vmatprep.subr.mxu0 0.0
    %1678 = vmatpush1.msra.mxu0 0.0
    %1679 = vmatprep.subr.mxu0 0.0
    %1680 = vmatpush1.msra.mxu0 0.0
    %1681 = vmatprep.subr.mxu0 0.0
    %1682 = vmatpush1.msra.mxu0 0.0
    %1683 = vmatprep.subr.mxu0 0.0
    %1684 = vmatpush1.msra.mxu0 0.0
    %1685 = vmatprep.subr.mxu0 0.0
    %1686 = vmatpush1.msra.mxu0 0.0
    %1687 = vmatprep.subr.mxu0 0.0
    %1688 = vmatpush1.msra.mxu0 0.0
    %1689 = vmatprep.subr.mxu0 0.0
    %1690 = vmatpush1.msra.mxu0 0.0
    %1691 = vmatprep.subr.mxu0 0.0
    %1692 = vmatpush1.msra.mxu0 0.0
    %1693 = vmatprep.subr.mxu0 0.0
    %1694 = vmatpush1.msra.mxu0 0.0
    %1695 = vmatprep.subr.mxu0 0.0
    %1696 = vmatpush1.msra.mxu0 0.0
    %1697 = vmatprep.subr.mxu0 0.0
    %1698 = vmatpush1.msra.mxu0 0.0
    %1699 = vmatprep.subr.mxu0 0.0
    %1700 = vmatpush1.msra.mxu0 0.0
    %1701 = vmatprep.subr.mxu0 0.0
    %1702 = vmatpush1.msra.mxu0 0.0
    %1703 = vmatprep.subr.mxu0 0.0
    %1704 = vmatpush1.msra.mxu0 %v1671
    %1705 = vmatprep.subr.mxu0 0.0
    %1706 = vmatpush2.msra.mxu0 0.0
    %1707 = vmatprep.subr.mxu0 0.0
    %1708 = vmatpush2.msra.mxu0 0.0
    %1709 = vmatprep.subr.mxu0 0.0
    %1710 = vmatpush2.msra.mxu0 0.0
    %1711 = vmatprep.subr.mxu0 0.0
    %1712 = vmatpush2.msra.mxu0 0.0
    %1713 = vmatprep.subr.mxu0 0.0
    %1714 = vmatpush2.msra.mxu0 0.0
    %1715 = vmatprep.subr.mxu0 0.0
    %1716 = vmatpush2.msra.mxu0 0.0
    %1717 = vmatprep.subr.mxu0 0.0
    %1718 = vmatpush2.msra.mxu0 0.0
    %1719 = vmatprep.subr.mxu0 0.0
    %1720 = vmatpush2.msra.mxu0 0.0
    %1721 = vmatprep.subr.mxu0 0.0
    %1722 = vmatpush2.msra.mxu0 0.0
    %1723 = vmatprep.subr.mxu0 0.0
    %1724 = vmatpush2.msra.mxu0 0.0
    %1725 = vmatprep.subr.mxu0 0.0
    %1726 = vmatpush2.msra.mxu0 0.0
    %1727 = vmatprep.subr.mxu0 0.0
    %1728 = vmatpush2.msra.mxu0 0.0
    %1729 = vmatprep.subr.mxu0 0.0
    %1730 = vmatpush2.msra.mxu0 0.0
    %1731 = vmatprep.subr.mxu0 0.0
    %1732 = vmatpush2.msra.mxu0 0.0
    %1733 = vmatprep.subr.mxu0 0.0
    %1734 = vmatpush2.msra.mxu0 0.0
    %1735 = vmatprep.subr.mxu0 0.0
    %1736 = vmatpush2.msra.mxu0 0.0
    %1737 = vmatprep.mubr.f32.mxu0 0.0
    %1738 = vmatmul.mubr.f32.gmra.mxu0 %v1668
    %v1739 = vpop.f32.mrf.mxu0
    %v1740 = vadd.f32 0.0, %v1739
    %v1741 = vpop.f32.mrf.mxu0
    %1742 = vdwg.mxu0
    %v1743 = vld [vmem:[#allocation2 + $0x4] sm:$0xf]
    %v1744 = vld [vmem:[#allocation2 + $0xc] sm:$0xf]
    %1747 = vrot.lane.b32.xlu0 %v1743, 16
    %v1748 = vpop.permute.xlu0 %1747
    %1749 = vrot.lane.b32.xlu0 %v1744, 16
    %v1750 = vpop.permute.xlu0 %1749
    %v1753 = vsel %vm42, %v1748, 0.0
    %1754 = vadd.xlane.f32.xlu0 %v1753
    %v1755 = vpop.xlane.xlu0 %1754
    %v1756 = vsel %vm42, %v1750, 0.0
    %1757 = vadd.xlane.f32.xlu0 %v1756
    %v1758 = vpop.xlane.xlu0 %1757
    %v1759 = vmul.f32 %v1755, %v49
    %v1760 = vmul.f32 %v1758, %v49
    %v1761 = vsel %vm858, %v1743, -inf
    %1762 = vmax.xlane.f32.xlu0 %v1761
    %v1763 = vpop.xlane.xlu0 %1762
    %v1764 = vsel %vm858, %v1744, -inf
    %1765 = vmax.xlane.f32.xlu0 %v1764
    %v1766 = vpop.xlane.xlu0 %1765
    %v1767 = vadd.f32 %v1759, %v1763
    %v1768 = vadd.f32 %v1760, %v1766
    %s1769 = scalar_lea.vmem [#allocation5], 60
    %v1770 = vld [vmem:[%s1769] sm:$0xf]
    %v1773 = vlaneseq
    %v1774 = vshrl.u32 %v1773, 7
    %v1775 = vsub.s32 %v64, %v1774
    %v1776 = vrot.slane %v1767, %v1775
    %v1777 = vlaneseq
    %v1778 = vshrl.u32 %v1777, 7
    %v1779 = vsub.s32 %v64, %v1778
    %v1780 = vrot.slane %v1768, %v1779
    %v1781 = vsel %vm73, %v1780, %v1776
    %v1782 = vsel %vm75, %v1781, 0
    %v1785 = vsel %vm78, %v1770, 0
    %1787 = vmatprep.subr.mxu0 0.0
    %1788 = vmatpush1.msra.mxu0 0.0
    %1789 = vmatprep.subr.mxu0 0.0
    %1790 = vmatpush1.msra.mxu0 0.0
    %1791 = vmatprep.subr.mxu0 0.0
    %1792 = vmatpush1.msra.mxu0 0.0
    %1793 = vmatprep.subr.mxu0 0.0
    %1794 = vmatpush1.msra.mxu0 0.0
    %1795 = vmatprep.subr.mxu0 0.0
    %1796 = vmatpush1.msra.mxu0 0.0
    %1797 = vmatprep.subr.mxu0 0.0
    %1798 = vmatpush1.msra.mxu0 0.0
    %1799 = vmatprep.subr.mxu0 0.0
    %1800 = vmatpush1.msra.mxu0 0.0
    %1801 = vmatprep.subr.mxu0 0.0
    %1802 = vmatpush1.msra.mxu0 0.0
    %1803 = vmatprep.subr.mxu0 0.0
    %1804 = vmatpush1.msra.mxu0 0.0
    %1805 = vmatprep.subr.mxu0 0.0
    %1806 = vmatpush1.msra.mxu0 0.0
    %1807 = vmatprep.subr.mxu0 0.0
    %1808 = vmatpush1.msra.mxu0 0.0
    %1809 = vmatprep.subr.mxu0 0.0
    %1810 = vmatpush1.msra.mxu0 0.0
    %1811 = vmatprep.subr.mxu0 0.0
    %1812 = vmatpush1.msra.mxu0 0.0
    %1813 = vmatprep.subr.mxu0 0.0
    %1814 = vmatpush1.msra.mxu0 0.0
    %1815 = vmatprep.subr.mxu0 0.0
    %1816 = vmatpush1.msra.mxu0 0.0
    %1817 = vmatprep.subr.mxu0 0.0
    %1818 = vmatpush1.msra.mxu0 %v1785
    %1819 = vmatprep.subr.mxu0 0.0
    %1820 = vmatpush2.msra.mxu0 0.0
    %1821 = vmatprep.subr.mxu0 0.0
    %1822 = vmatpush2.msra.mxu0 0.0
    %1823 = vmatprep.subr.mxu0 0.0
    %1824 = vmatpush2.msra.mxu0 0.0
    %1825 = vmatprep.subr.mxu0 0.0
    %1826 = vmatpush2.msra.mxu0 0.0
    %1827 = vmatprep.subr.mxu0 0.0
    %1828 = vmatpush2.msra.mxu0 0.0
    %1829 = vmatprep.subr.mxu0 0.0
    %1830 = vmatpush2.msra.mxu0 0.0
    %1831 = vmatprep.subr.mxu0 0.0
    %1832 = vmatpush2.msra.mxu0 0.0
    %1833 = vmatprep.subr.mxu0 0.0
    %1834 = vmatpush2.msra.mxu0 0.0
    %1835 = vmatprep.subr.mxu0 0.0
    %1836 = vmatpush2.msra.mxu0 0.0
    %1837 = vmatprep.subr.mxu0 0.0
    %1838 = vmatpush2.msra.mxu0 0.0
    %1839 = vmatprep.subr.mxu0 0.0
    %1840 = vmatpush2.msra.mxu0 0.0
    %1841 = vmatprep.subr.mxu0 0.0
    %1842 = vmatpush2.msra.mxu0 0.0
    %1843 = vmatprep.subr.mxu0 0.0
    %1844 = vmatpush2.msra.mxu0 0.0
    %1845 = vmatprep.subr.mxu0 0.0
    %1846 = vmatpush2.msra.mxu0 0.0
    %1847 = vmatprep.subr.mxu0 0.0
    %1848 = vmatpush2.msra.mxu0 0.0
    %1849 = vmatprep.subr.mxu0 0.0
    %1850 = vmatpush2.msra.mxu0 0.0
    %1851 = vmatprep.mubr.f32.mxu0 0.0
    %1852 = vmatmul.mubr.f32.gmra.mxu0 %v1782
    %v1853 = vpop.f32.mrf.mxu0
    %v1854 = vadd.f32 0.0, %v1853
    %v1855 = vpop.f32.mrf.mxu0
    %1856 = vdwg.mxu0
    %1858 = vrot.lane.b32.xlu0 %v262, 32
    %v1859 = vpop.permute.xlu0 %1858
    %1862 = vrot.lane.b32.xlu0 %v377, 64
    %v1863 = vpop.permute.xlu0 %1862
    %1866 = vrot.lane.b32.xlu0 %v492, 96
    %v1867 = vpop.permute.xlu0 %1866
    %1870 = vrot.lane.b32.xlu0 %v722, 32
    %v1871 = vpop.permute.xlu0 %1870
    %1874 = vrot.lane.b32.xlu0 %v837, 64
    %v1875 = vpop.permute.xlu0 %1874
    %1878 = vrot.lane.b32.xlu0 %v952, 96
    %v1879 = vpop.permute.xlu0 %1878
    %1882 = vrot.lane.b32.xlu0 %v1170, 32
    %v1883 = vpop.permute.xlu0 %1882
    %1886 = vrot.lane.b32.xlu0 %v1284, 64
    %v1887 = vpop.permute.xlu0 %1886
    %1890 = vrot.lane.b32.xlu0 %v1398, 96
    %v1891 = vpop.permute.xlu0 %1890
    %1894 = vrot.lane.b32.xlu0 %v1626, 32
    %v1895 = vpop.permute.xlu0 %1894
    %1898 = vrot.lane.b32.xlu0 %v1740, 64
    %v1899 = vpop.permute.xlu0 %1898
    %1902 = vrot.lane.b32.xlu0 %v1854, 96
    %v1903 = vpop.permute.xlu0 %1902
    %vm1905 = vcmask 261120
    %v1906 = vsel %vm1905, %v149, %v1859
    %vm1907 = vcmask 523264
    %v1908 = vsel %vm1907, %v1906, %v1863
    %vm1909 = vcmask 785408
    %v1910 = vsel %vm1909, %v1908, %v1867
    %v1911 = vsel %vm1905, %v607, %v1871
    %v1912 = vsel %vm1907, %v1911, %v1875
    %v1913 = vsel %vm1909, %v1912, %v1879
    %v1914 = vsel %vm1905, %v1058, %v1883
    %v1915 = vsel %vm1907, %v1914, %v1887
    %v1916 = vsel %vm1909, %v1915, %v1891
    %v1917 = vsel %vm1905, %v1512, %v1895
    %v1918 = vsel %vm1907, %v1917, %v1899
    %v1919 = vsel %vm1909, %v1918, %v1903
    %v1924 = vcombine.low %v1910, %v1913
    %v1925 = vcombine.low %v1916, %v1919
    %v1927 = vunpack.c.l.s4 1983009808
    %v1928 = vunpack.c.0.s8 %v1927
    %v1929 = vlaneseq
    %v1930 = vshrl.u32 %v1929, 7
    %v1931 = vsub.s32 %v1928, %v1930
    %v1932 = vrot.slane %v1924, %v1931
    %v1934 = vunpack.c.l.s4 1983009808
    %v1935 = vunpack.c.0.s8 %v1934
    %v1936 = vlaneseq
    %v1937 = vshrl.u32 %v1936, 7
    %v1938 = vsub.s32 %v1935, %v1937
    %v1939 = vrot.slane %v1925, %v1938
    %v1940 = vcombine.low %v1932, %v1939
    %1942 = vst [vmem:[#allocation7] sm:$0xff] %v1940
    // Predicated region
    $region18: #{tpu_custom_call.1} parent=1 // pred_check
      _
    $region19: #{tpu_custom_call.1} parent=1 // pred_check_branch
      %1944 = sbr.rel (0) target = $region21
    $region20: #{tpu_custom_call.1} parent=1 // pred_region
      %s1946 = ssub.s32 128, 128
      %1947 = vsyncadd [#allocation4], %s1946
      %s1949 = sshll.u32 [#allocation7], 4
      %s1950 = int_to_ptr.vmem [resolvable:$true] %s1949
      %1952 = dma.vmem_to_hbm [thread:$0]  %s1950, 128, %s2, [#allocation4]
    $region21: #{tpu_custom_call.1} parent=1 // pred_fallthru
      _
    // Predicated region
    $region22: #{tpu_custom_call.1} parent=1 // pred_check
      _
    $region23: #{tpu_custom_call.1} parent=1 // pred_check_branch
      %1954 = sbr.rel (0) target = $region25
    $region24: #{tpu_custom_call.1} parent=1 // pred_region
      %1955 = dma.done [#allocation4], 128
    $region25: #{tpu_custom_call.1} parent=1 // pred_fallthru
      _
    %1956 = vsyncpa [#allocation3], 1
    %1957 = vsyncpa [#allocation6], 1
    %1958 = vsyncpa [#allocation4], 1

</llo_original>
